<compile_context>
chip_gen: v7x
topology: tpu7x:2x2x1
jax: 0.10.0
libtpu: 0.0.40
codegen_flags: <defaults>
</compile_context>

<pallas_src>
import math

import jax
import jax.numpy as jnp
from jax.experimental import pallas as pl
from jax.experimental.pallas import tpu as pltpu

DIM_EMBEDDING_CAR = 110
DIM_EMBEDDING_CAT = 18
D_IN = DIM_EMBEDDING_CAR + DIM_EMBEDDING_CAT   # 128
LANE = 128
NEG_BIG = -1e30                                # "minus infinity" for padded logits


def _round_up(x, m):
    return ((x + m - 1) // m) * m


# ----------------------------------------------------------------------------
# Kernel: whole sequence in one invocation, time loop fully unrolled.
# ----------------------------------------------------------------------------
def rnn_seq_kernel(x_ref, h0_ref, c0_ref, w_ih_ref, b_ref, w_hh_ref,
                   w_out_ref, b_out_ref, logp_ref, h_out_ref, c_out_ref):
    T = x_ref.shape[0]
    H = h0_ref.shape[1]

    # Non-recurrent input projection for ALL timesteps: one (T,128)@(128,4H)
    # MXU matmul; fused LSTM bias folded in here, off the serial path.
    xproj = (jnp.dot(x_ref[...], w_ih_ref[...],
                     preferred_element_type=jnp.float32) + b_ref[...])     # (T, 4H)

    w_hh = w_hh_ref[...]        # (H, 4H)     resident
    w_out = w_out_ref[...]      # (H, O_pad)  resident
    b_out = b_out_ref[...]      # (1, O_pad)

    h = h0_ref[...]             # (1, H)
    c = c0_ref[...]             # (1, H)

    # Fully unrolled time loop: only the K=32 hidden matmul + gate math is on
    # the serial h/c dependence chain.
    for t in range(T):
        gates = xproj[t:t + 1, :] + jnp.dot(
            h, w_hh, preferred_element_type=jnp.float32)                   # (1, 4H)

        # Two transcendental passes on the full 128-lane gate vector, then
        # slice.  PyTorch LSTM gate order: i, f, g, o.
        sig = jax.nn.sigmoid(gates)
        th = jnp.tanh(gates)
        i_g = sig[:, 0:H]
        f_g = sig[:, H:2 * H]
        g_g = th[:, 2 * H:3 * H]
        o_g = sig[:, 3 * H:4 * H]

        c = f_g * c + i_g * g_g
        h = o_g * jnp.tanh(c)

        # Output projection + log-softmax.  Padded bias lanes are -1e30, so
        # exp underflows to 0 and the normalizer over 128 lanes is exact.
        logits = jnp.dot(h, w_out, preferred_element_type=jnp.float32) + b_out
        m = jnp.max(logits, axis=-1, keepdims=True)
        z = logits - m
        lse = jnp.log(jnp.sum(jnp.exp(z), axis=-1, keepdims=True))
        logp_ref[t:t + 1, :] = z - lse      # static row index, resident block

    h_out_ref[...] = h
    c_out_ref[...] = c


# ----------------------------------------------------------------------------
# Parameter init (mirrors nn.Embedding / nn.LSTM / nn.Linear defaults).
# ----------------------------------------------------------------------------
def init_params(key, input_size, n_categories, hidden_size, output_size):
    ks = jax.random.split(key, 8)
    H = hidden_size

    def unif(k, shape, scale):
        return jax.random.uniform(k, shape, jnp.float32, -scale, scale)

    k_lstm = 1.0 / math.sqrt(H)
    k_lin = 1.0 / math.sqrt(H)
    return dict(
        emb_car=jax.random.normal(ks[0], (input_size, DIM_EMBEDDING_CAR), jnp.float32),
        emb_cat=jax.random.normal(ks[1], (n_categories, DIM_EMBEDDING_CAT), jnp.float32),
        w_ih=unif(ks[2], (4 * H, D_IN), k_lstm),
        w_hh=unif(ks[3], (4 * H, H), k_lstm),
        b_ih=unif(ks[4], (4 * H,), k_lstm),
        b_hh=unif(ks[5], (4 * H,), k_lstm),
        w_out=unif(ks[6], (output_size, H), k_lin),
        b_out=unif(ks[7], (output_size,), k_lin),
    )


def prepare_kernel_params(params):
    """One-time weight preprocessing (hoisted out of the per-call forward)."""
    H = params["w_hh"].shape[1]
    O = params["b_out"].shape[0]
    O_pad = _round_up(max(O, LANE), LANE)

    w_ih_t = params["w_ih"].T.astype(jnp.float32)                        # (D_IN, 4H)
    w_hh_t = params["w_hh"].T.astype(jnp.float32)                        # (H, 4H)
    b = (params["b_ih"] + params["b_hh"]).reshape(1, -1).astype(jnp.float32)
    w_out_pad = jnp.zeros((H, O_pad), jnp.float32).at[:, :O].set(params["w_out"].T)
    b_out_pad = jnp.full((1, O_pad), NEG_BIG, jnp.float32).at[:, :O].set(params["b_out"])
    return dict(w_ih_t=w_ih_t, w_hh_t=w_hh_t, b=b,
                w_out_pad=w_out_pad, b_out_pad=b_out_pad,
                H=H, O=O, O_pad=O_pad)


# ----------------------------------------------------------------------------
# Forward passes.
# ----------------------------------------------------------------------------
def rnn_forward_sequence(params, kparams, category, inputs, hidden):
    """Forward over a whole character sequence: ONE pallas_call, no grid."""
    H, O, O_pad = kparams["H"], kparams["O"], kparams["O_pad"]
    T = int(inputs.shape[0])

    # Embedding gathers + concat: pure indexing glue, done once per sequence.
    car = params["emb_car"][inputs]                                      # (T, 110)
    cat = jnp.broadcast_to(params["emb_cat"][category].reshape(1, -1),
                           (T, DIM_EMBEDDING_CAT))                       # (T, 18)
    x_seq = jnp.concatenate([car, cat], axis=1).astype(jnp.float32)      # (T, 128)

    h0, c0 = hidden
    h0_2d = h0.reshape(1, H).astype(jnp.float32)
    c0_2d = c0.reshape(1, H).astype(jnp.float32)

    def vmem():
        return pl.BlockSpec(memory_space=pltpu.MemorySpace.VMEM)

    logp_pad, h1, c1 = pl.pallas_call(
        rnn_seq_kernel,
        out_shape=(
            jax.ShapeDtypeStruct((T, O_pad), jnp.float32),
            jax.ShapeDtypeStruct((1, H), jnp.float32),
            jax.ShapeDtypeStruct((1, H), jnp.float32),
        ),
        in_specs=[vmem() for _ in range(8)],
        out_specs=(vmem(), vmem(), vmem()),
    )(x_seq, h0_2d, c0_2d,
      kparams["w_ih_t"], kparams["b"], kparams["w_hh_t"],
      kparams["w_out_pad"], kparams["b_out_pad"])

    logp = logp_pad[:, :O]                                               # drop padding
    return logp, (h1.reshape(1, 1, H), c1.reshape(1, 1, H))


def rnn_forward(params, kparams, category, inp, hidden):
    """Single-step API matching RNN.forward(category, input, hidden)."""
    logp, hidden = rnn_forward_sequence(params, kparams, category,
                                        inp.reshape(-1), hidden)
    return logp.reshape(-1), hidden


def init_hidden(hidden_size):
    return (jnp.zeros((1, 1, hidden_size), jnp.float32),
            jnp.zeros((1, 1, hidden_size), jnp.float32))


# Pure-JAX reference (per-step loop, highest matmul precision) for checking.
def reference_forward_sequence(params, category, inputs, hidden):
    H = params["w_hh"].shape[1]
    hi = jax.lax.Precision.HIGHEST
    h, c = hidden
    h = h.reshape(1, H)
    c = c.reshape(1, H)
    cat = params["emb_cat"][category].reshape(1, -1)
    outs = []
    for t in range(int(inputs.shape[0])):
        car = params["emb_car"][inputs[t]].reshape(1, -1)
        x = jnp.concatenate([car, cat], axis=1)
        gates = (jnp.dot(x, params["w_ih"].T, precision=hi)
                 + jnp.dot(h, params["w_hh"].T, precision=hi)
                 + params["b_ih"] + params["b_hh"])
        i_g = jax.nn.sigmoid(gates[:, 0:H])
        f_g = jax.nn.sigmoid(gates[:, H:2 * H])
        g_g = jnp.tanh(gates[:, 2 * H:3 * H])
        o_g = jax.nn.sigmoid(gates[:, 3 * H:4 * H])
        c = f_g * c + i_g * g_g
        h = o_g * jnp.tanh(c)
        logits = jnp.dot(h, params["w_out"].T, precision=hi) + params["b_out"]
        outs.append(jax.nn.log_softmax(logits, axis=-1))
    return jnp.concatenate(outs, axis=0), (h, c)


if __name__ == "__main__":
    input_size = 59      # character vocabulary
    n_categories = 18
    hidden_size = 32
    output_size = 59
    seq_len = 8

    key = jax.random.PRNGKey(0)
    pkey, ikey = jax.random.split(key, 2)
    params = init_params(pkey, input_size, n_categories, hidden_size, output_size)
    kparams = prepare_kernel_params(params)   # weight prep done ONCE

    category = jnp.array([3], dtype=jnp.int32)
    inputs = jax.random.randint(ikey, (seq_len,), 0, input_size, dtype=jnp.int32)
    hidden = init_hidden(hidden_size)

    # Fused sequence forward: one pallas_call for all timesteps.
    logp_seq, (h1, c1) = rnn_forward_sequence(params, kparams, category, inputs, hidden)
    jax.block_until_ready((logp_seq, h1, c1))

    assert logp_seq.shape == (seq_len, output_size)
    assert h1.shape == (1, 1, hidden_size) and c1.shape == (1, 1, hidden_size)

    # Per-step probabilities sum to ~1 (valid log-softmax).
    prob_sums = jnp.sum(jnp.exp(logp_seq), axis=-1)
    assert bool(jnp.all(jnp.abs(prob_sums - 1.0) < 1e-4))

    # Match the pure-JAX reference LSTM loop.
    ref_logp, (ref_h, ref_c) = reference_forward_sequence(params, category, inputs, hidden)
    assert bool(jnp.allclose(logp_seq, ref_logp, atol=1e-3, rtol=1e-3))
    assert bool(jnp.allclose(h1.reshape(1, -1), ref_h, atol=1e-3, rtol=1e-3))
    assert bool(jnp.allclose(c1.reshape(1, -1), ref_c, atol=1e-3, rtol=1e-3))

    # Single-step API (mirrors the PyTorch module's forward()).
    out_step, (hs, cs) = rnn_forward(params, kparams, category,
                                     jnp.array([7], dtype=jnp.int32), hidden)
    jax.block_until_ready((out_step, hs, cs))
    assert out_step.shape == (output_size,)
    assert abs(float(jnp.sum(jnp.exp(out_step))) - 1.0) < 1e-4

    print("KERNEL_OK")
</pallas_src>

<mosaic_0001>
module attributes {stable_mosaic.version = 11 : i64} {
  func.func @rnn_seq_kernel(%arg0: memref<8x128xf32, #tpu.memory_space<vmem>>, %arg1: memref<1x32xf32, #tpu.memory_space<vmem>>, %arg2: memref<1x32xf32, #tpu.memory_space<vmem>>, %arg3: memref<128x128xf32, #tpu.memory_space<vmem>>, %arg4: memref<1x128xf32, #tpu.memory_space<vmem>>, %arg5: memref<32x128xf32, #tpu.memory_space<vmem>>, %arg6: memref<32x128xf32, #tpu.memory_space<vmem>>, %arg7: memref<1x128xf32, #tpu.memory_space<vmem>>, %arg8: memref<8x128xf32, #tpu.memory_space<vmem>>, %arg9: memref<1x32xf32, #tpu.memory_space<vmem>>, %arg10: memref<1x32xf32, #tpu.memory_space<vmem>>) attributes {dimension_semantics = [], scalar_prefetch = 0 : i64, scratch_operands = 0 : i64, tpu.core_type = #tpu.core_type<tc>} {
    %c0 = arith.constant 0 : index
    %c0_0 = arith.constant 0 : index
    %0 = vector.load %arg0[%c0, %c0_0] : memref<8x128xf32, #tpu.memory_space<vmem>>, vector<8x128xf32>
    %c0_1 = arith.constant 0 : index
    %c0_2 = arith.constant 0 : index
    %1 = vector.load %arg3[%c0_1, %c0_2] : memref<128x128xf32, #tpu.memory_space<vmem>>, vector<128x128xf32>
    %cst = arith.constant dense<0.000000e+00> : vector<8x128xf32>
    %2 = tpu.matmul %0, %1, %cst {dimension_numbers = #tpu.dot_dimension_numbers<[1], [0], [0], [1], [0, 0, 1, 1], [], []>} : vector<8x128xf32>, vector<128x128xf32>, vector<8x128xf32> -> vector<8x128xf32>
    %c0_3 = arith.constant 0 : index
    %c0_4 = arith.constant 0 : index
    %3 = vector.load %arg4[%c0_3, %c0_4] : memref<1x128xf32, #tpu.memory_space<vmem>>, vector<1x128xf32>
    %4 = vector.broadcast %3 : vector<1x128xf32> to vector<8x128xf32>
    %5 = arith.addf %2, %4 : vector<8x128xf32>
    %c0_5 = arith.constant 0 : index
    %c0_6 = arith.constant 0 : index
    %6 = vector.load %arg5[%c0_5, %c0_6] : memref<32x128xf32, #tpu.memory_space<vmem>>, vector<32x128xf32>
    %c0_7 = arith.constant 0 : index
    %c0_8 = arith.constant 0 : index
    %7 = vector.load %arg6[%c0_7, %c0_8] : memref<32x128xf32, #tpu.memory_space<vmem>>, vector<32x128xf32>
    %c0_9 = arith.constant 0 : index
    %c0_10 = arith.constant 0 : index
    %8 = vector.load %arg7[%c0_9, %c0_10] : memref<1x128xf32, #tpu.memory_space<vmem>>, vector<1x128xf32>
    %c0_11 = arith.constant 0 : index
    %c0_12 = arith.constant 0 : index
    %9 = vector.load %arg1[%c0_11, %c0_12] : memref<1x32xf32, #tpu.memory_space<vmem>>, vector<1x32xf32>
    %c0_13 = arith.constant 0 : index
    %c0_14 = arith.constant 0 : index
    %10 = vector.load %arg2[%c0_13, %c0_14] : memref<1x32xf32, #tpu.memory_space<vmem>>, vector<1x32xf32>
    %11 = vector.extract_strided_slice %5 {offsets = [0, 0], sizes = [1, 128], strides = [1, 1]} : vector<8x128xf32> to vector<1x128xf32>
    %cst_15 = arith.constant dense<0.000000e+00> : vector<1x128xf32>
    %12 = tpu.matmul %9, %6, %cst_15 {dimension_numbers = #tpu.dot_dimension_numbers<[1], [0], [0], [1], [0, 0, 1, 1], [], []>} : vector<1x32xf32>, vector<32x128xf32>, vector<1x128xf32> -> vector<1x128xf32>
    %13 = arith.addf %11, %12 : vector<1x128xf32>
    %14 = arith.negf %13 : vector<1x128xf32>
    %15 = math.exp %14 : vector<1x128xf32>
    %cst_16 = arith.constant 1.000000e+00 : f32
    %16 = vector.broadcast %cst_16 : f32 to vector<1x128xf32>
    %17 = arith.addf %16, %15 : vector<1x128xf32>
    %18 = arith.divf %16, %17 : vector<1x128xf32>
    %19 = math.tanh %13 : vector<1x128xf32>
    %20 = vector.extract_strided_slice %18 {offsets = [0, 0], sizes = [1, 32], strides = [1, 1]} : vector<1x128xf32> to vector<1x32xf32>
    %21 = vector.extract_strided_slice %18 {offsets = [0, 32], sizes = [1, 32], strides = [1, 1]} : vector<1x128xf32> to vector<1x32xf32>
    %22 = vector.extract_strided_slice %19 {offsets = [0, 64], sizes = [1, 32], strides = [1, 1]} : vector<1x128xf32> to vector<1x32xf32>
    %23 = vector.extract_strided_slice %18 {offsets = [0, 96], sizes = [1, 32], strides = [1, 1]} : vector<1x128xf32> to vector<1x32xf32>
    %24 = arith.mulf %21, %10 : vector<1x32xf32>
    %25 = arith.mulf %20, %22 : vector<1x32xf32>
    %26 = arith.addf %24, %25 : vector<1x32xf32>
    %27 = math.tanh %26 : vector<1x32xf32>
    %28 = arith.mulf %23, %27 : vector<1x32xf32>
    %cst_17 = arith.constant dense<0.000000e+00> : vector<1x128xf32>
    %29 = tpu.matmul %28, %7, %cst_17 {dimension_numbers = #tpu.dot_dimension_numbers<[1], [0], [0], [1], [0, 0, 1, 1], [], []>} : vector<1x32xf32>, vector<32x128xf32>, vector<1x128xf32> -> vector<1x128xf32>
    %30 = arith.addf %29, %8 : vector<1x128xf32>
    %cst_18 = arith.constant dense<0xFF800000> : vector<1xf32>
    %31 = vector.multi_reduction <maximumf>, %30, %cst_18 [1] : vector<1x128xf32> to vector<1xf32>
    %32 = vector.shape_cast %31 : vector<1xf32> to vector<1x1xf32>
    %33 = vector.broadcast %32 : vector<1x1xf32> to vector<1x128xf32>
    %34 = arith.subf %30, %33 : vector<1x128xf32>
    %35 = math.exp %34 : vector<1x128xf32>
    %cst_19 = arith.constant dense<0.000000e+00> : vector<1xf32>
    %36 = vector.multi_reduction <add>, %35, %cst_19 [1] : vector<1x128xf32> to vector<1xf32>
    %37 = vector.shape_cast %36 : vector<1xf32> to vector<1x1xf32>
    %38 = math.log %37 : vector<1x1xf32>
    %39 = vector.broadcast %38 : vector<1x1xf32> to vector<1x128xf32>
    %40 = arith.subf %34, %39 : vector<1x128xf32>
    %c0_20 = arith.constant 0 : index
    %c0_21 = arith.constant 0 : index
    %41 = vector.load %arg8[%c0_20, %c0_21] : memref<8x128xf32, #tpu.memory_space<vmem>>, vector<1x128xf32>
    tpu.vector_store %arg8[%c0_20, %c0_21], %40 {strides = array<i32>} : memref<8x128xf32, #tpu.memory_space<vmem>>, vector<1x128xf32>,
    %42 = vector.extract_strided_slice %5 {offsets = [1, 0], sizes = [1, 128], strides = [1, 1]} : vector<8x128xf32> to vector<1x128xf32>
    %cst_22 = arith.constant dense<0.000000e+00> : vector<1x128xf32>
    %43 = tpu.matmul %28, %6, %cst_22 {dimension_numbers = #tpu.dot_dimension_numbers<[1], [0], [0], [1], [0, 0, 1, 1], [], []>} : vector<1x32xf32>, vector<32x128xf32>, vector<1x128xf32> -> vector<1x128xf32>
    %44 = arith.addf %42, %43 : vector<1x128xf32>
    %45 = arith.negf %44 : vector<1x128xf32>
    %46 = math.exp %45 : vector<1x128xf32>
    %cst_23 = arith.constant 1.000000e+00 : f32
    %47 = vector.broadcast %cst_23 : f32 to vector<1x128xf32>
    %48 = arith.addf %47, %46 : vector<1x128xf32>
    %49 = arith.divf %47, %48 : vector<1x128xf32>
    %50 = math.tanh %44 : vector<1x128xf32>
    %51 = vector.extract_strided_slice %49 {offsets = [0, 0], sizes = [1, 32], strides = [1, 1]} : vector<1x128xf32> to vector<1x32xf32>
    %52 = vector.extract_strided_slice %49 {offsets = [0, 32], sizes = [1, 32], strides = [1, 1]} : vector<1x128xf32> to vector<1x32xf32>
    %53 = vector.extract_strided_slice %50 {offsets = [0, 64], sizes = [1, 32], strides = [1, 1]} : vector<1x128xf32> to vector<1x32xf32>
    %54 = vector.extract_strided_slice %49 {offsets = [0, 96], sizes = [1, 32], strides = [1, 1]} : vector<1x128xf32> to vector<1x32xf32>
    %55 = arith.mulf %52, %26 : vector<1x32xf32>
    %56 = arith.mulf %51, %53 : vector<1x32xf32>
    %57 = arith.addf %55, %56 : vector<1x32xf32>
    %58 = math.tanh %57 : vector<1x32xf32>
    %59 = arith.mulf %54, %58 : vector<1x32xf32>
    %cst_24 = arith.constant dense<0.000000e+00> : vector<1x128xf32>
    %60 = tpu.matmul %59, %7, %cst_24 {dimension_numbers = #tpu.dot_dimension_numbers<[1], [0], [0], [1], [0, 0, 1, 1], [], []>} : vector<1x32xf32>, vector<32x128xf32>, vector<1x128xf32> -> vector<1x128xf32>
    %61 = arith.addf %60, %8 : vector<1x128xf32>
    %cst_25 = arith.constant dense<0xFF800000> : vector<1xf32>
    %62 = vector.multi_reduction <maximumf>, %61, %cst_25 [1] : vector<1x128xf32> to vector<1xf32>
    %63 = vector.shape_cast %62 : vector<1xf32> to vector<1x1xf32>
    %64 = vector.broadcast %63 : vector<1x1xf32> to vector<1x128xf32>
    %65 = arith.subf %61, %64 : vector<1x128xf32>
    %66 = math.exp %65 : vector<1x128xf32>
    %cst_26 = arith.constant dense<0.000000e+00> : vector<1xf32>
    %67 = vector.multi_reduction <add>, %66, %cst_26 [1] : vector<1x128xf32> to vector<1xf32>
    %68 = vector.shape_cast %67 : vector<1xf32> to vector<1x1xf32>
    %69 = math.log %68 : vector<1x1xf32>
    %70 = vector.broadcast %69 : vector<1x1xf32> to vector<1x128xf32>
    %71 = arith.subf %65, %70 : vector<1x128xf32>
    %c1 = arith.constant 1 : index
    %c0_27 = arith.constant 0 : index
    %72 = vector.load %arg8[%c1, %c0_27] : memref<8x128xf32, #tpu.memory_space<vmem>>, vector<1x128xf32>
    tpu.vector_store %arg8[%c1, %c0_27], %71 {strides = array<i32>} : memref<8x128xf32, #tpu.memory_space<vmem>>, vector<1x128xf32>,
    %73 = vector.extract_strided_slice %5 {offsets = [2, 0], sizes = [1, 128], strides = [1, 1]} : vector<8x128xf32> to vector<1x128xf32>
    %cst_28 = arith.constant dense<0.000000e+00> : vector<1x128xf32>
    %74 = tpu.matmul %59, %6, %cst_28 {dimension_numbers = #tpu.dot_dimension_numbers<[1], [0], [0], [1], [0, 0, 1, 1], [], []>} : vector<1x32xf32>, vector<32x128xf32>, vector<1x128xf32> -> vector<1x128xf32>
    %75 = arith.addf %73, %74 : vector<1x128xf32>
    %76 = arith.negf %75 : vector<1x128xf32>
    %77 = math.exp %76 : vector<1x128xf32>
    %cst_29 = arith.constant 1.000000e+00 : f32
    %78 = vector.broadcast %cst_29 : f32 to vector<1x128xf32>
    %79 = arith.addf %78, %77 : vector<1x128xf32>
    %80 = arith.divf %78, %79 : vector<1x128xf32>
    %81 = math.tanh %75 : vector<1x128xf32>
    %82 = vector.extract_strided_slice %80 {offsets = [0, 0], sizes = [1, 32], strides = [1, 1]} : vector<1x128xf32> to vector<1x32xf32>
    %83 = vector.extract_strided_slice %80 {offsets = [0, 32], sizes = [1, 32], strides = [1, 1]} : vector<1x128xf32> to vector<1x32xf32>
    %84 = vector.extract_strided_slice %81 {offsets = [0, 64], sizes = [1, 32], strides = [1, 1]} : vector<1x128xf32> to vector<1x32xf32>
    %85 = vector.extract_strided_slice %80 {offsets = [0, 96], sizes = [1, 32], strides = [1, 1]} : vector<1x128xf32> to vector<1x32xf32>
    %86 = arith.mulf %83, %57 : vector<1x32xf32>
    %87 = arith.mulf %82, %84 : vector<1x32xf32>
    %88 = arith.addf %86, %87 : vector<1x32xf32>
    %89 = math.tanh %88 : vector<1x32xf32>
    %90 = arith.mulf %85, %89 : vector<1x32xf32>
    %cst_30 = arith.constant dense<0.000000e+00> : vector<1x128xf32>
    %91 = tpu.matmul %90, %7, %cst_30 {dimension_numbers = #tpu.dot_dimension_numbers<[1], [0], [0], [1], [0, 0, 1, 1], [], []>} : vector<1x32xf32>, vector<32x128xf32>, vector<1x128xf32> -> vector<1x128xf32>
    %92 = arith.addf %91, %8 : vector<1x128xf32>
    %cst_31 = arith.constant dense<0xFF800000> : vector<1xf32>
    %93 = vector.multi_reduction <maximumf>, %92, %cst_31 [1] : vector<1x128xf32> to vector<1xf32>
    %94 = vector.shape_cast %93 : vector<1xf32> to vector<1x1xf32>
    %95 = vector.broadcast %94 : vector<1x1xf32> to vector<1x128xf32>
    %96 = arith.subf %92, %95 : vector<1x128xf32>
    %97 = math.exp %96 : vector<1x128xf32>
    %cst_32 = arith.constant dense<0.000000e+00> : vector<1xf32>
    %98 = vector.multi_reduction <add>, %97, %cst_32 [1] : vector<1x128xf32> to vector<1xf32>
    %99 = vector.shape_cast %98 : vector<1xf32> to vector<1x1xf32>
    %100 = math.log %99 : vector<1x1xf32>
    %101 = vector.broadcast %100 : vector<1x1xf32> to vector<1x128xf32>
    %102 = arith.subf %96, %101 : vector<1x128xf32>
    %c2 = arith.constant 2 : index
    %c0_33 = arith.constant 0 : index
    %103 = vector.load %arg8[%c2, %c0_33] : memref<8x128xf32, #tpu.memory_space<vmem>>, vector<1x128xf32>
    tpu.vector_store %arg8[%c2, %c0_33], %102 {strides = array<i32>} : memref<8x128xf32, #tpu.memory_space<vmem>>, vector<1x128xf32>,
    %104 = vector.extract_strided_slice %5 {offsets = [3, 0], sizes = [1, 128], strides = [1, 1]} : vector<8x128xf32> to vector<1x128xf32>
    %cst_34 = arith.constant dense<0.000000e+00> : vector<1x128xf32>
    %105 = tpu.matmul %90, %6, %cst_34 {dimension_numbers = #tpu.dot_dimension_numbers<[1], [0], [0], [1], [0, 0, 1, 1], [], []>} : vector<1x32xf32>, vector<32x128xf32>, vector<1x128xf32> -> vector<1x128xf32>
    %106 = arith.addf %104, %105 : vector<1x128xf32>
    %107 = arith.negf %106 : vector<1x128xf32>
    %108 = math.exp %107 : vector<1x128xf32>
    %cst_35 = arith.constant 1.000000e+00 : f32
    %109 = vector.broadcast %cst_35 : f32 to vector<1x128xf32>
    %110 = arith.addf %109, %108 : vector<1x128xf32>
    %111 = arith.divf %109, %110 : vector<1x128xf32>
    %112 = math.tanh %106 : vector<1x128xf32>
    %113 = vector.extract_strided_slice %111 {offsets = [0, 0], sizes = [1, 32], strides = [1, 1]} : vector<1x128xf32> to vector<1x32xf32>
    %114 = vector.extract_strided_slice %111 {offsets = [0, 32], sizes = [1, 32], strides = [1, 1]} : vector<1x128xf32> to vector<1x32xf32>
    %115 = vector.extract_strided_slice %112 {offsets = [0, 64], sizes = [1, 32], strides = [1, 1]} : vector<1x128xf32> to vector<1x32xf32>
    %116 = vector.extract_strided_slice %111 {offsets = [0, 96], sizes = [1, 32], strides = [1, 1]} : vector<1x128xf32> to vector<1x32xf32>
    %117 = arith.mulf %114, %88 : vector<1x32xf32>
    %118 = arith.mulf %113, %115 : vector<1x32xf32>
    %119 = arith.addf %117, %118 : vector<1x32xf32>
    %120 = math.tanh %119 : vector<1x32xf32>
    %121 = arith.mulf %116, %120 : vector<1x32xf32>
    %cst_36 = arith.constant dense<0.000000e+00> : vector<1x128xf32>
    %122 = tpu.matmul %121, %7, %cst_36 {dimension_numbers = #tpu.dot_dimension_numbers<[1], [0], [0], [1], [0, 0, 1, 1], [], []>} : vector<1x32xf32>, vector<32x128xf32>, vector<1x128xf32> -> vector<1x128xf32>
    %123 = arith.addf %122, %8 : vector<1x128xf32>
    %cst_37 = arith.constant dense<0xFF800000> : vector<1xf32>
    %124 = vector.multi_reduction <maximumf>, %123, %cst_37 [1] : vector<1x128xf32> to vector<1xf32>
    %125 = vector.shape_cast %124 : vector<1xf32> to vector<1x1xf32>
    %126 = vector.broadcast %125 : vector<1x1xf32> to vector<1x128xf32>
    %127 = arith.subf %123, %126 : vector<1x128xf32>
    %128 = math.exp %127 : vector<1x128xf32>
    %cst_38 = arith.constant dense<0.000000e+00> : vector<1xf32>
    %129 = vector.multi_reduction <add>, %128, %cst_38 [1] : vector<1x128xf32> to vector<1xf32>
    %130 = vector.shape_cast %129 : vector<1xf32> to vector<1x1xf32>
    %131 = math.log %130 : vector<1x1xf32>
    %132 = vector.broadcast %131 : vector<1x1xf32> to vector<1x128xf32>
    %133 = arith.subf %127, %132 : vector<1x128xf32>
    %c3 = arith.constant 3 : index
    %c0_39 = arith.constant 0 : index
    %134 = vector.load %arg8[%c3, %c0_39] : memref<8x128xf32, #tpu.memory_space<vmem>>, vector<1x128xf32>
    tpu.vector_store %arg8[%c3, %c0_39], %133 {strides = array<i32>} : memref<8x128xf32, #tpu.memory_space<vmem>>, vector<1x128xf32>,
    %135 = vector.extract_strided_slice %5 {offsets = [4, 0], sizes = [1, 128], strides = [1, 1]} : vector<8x128xf32> to vector<1x128xf32>
    %cst_40 = arith.constant dense<0.000000e+00> : vector<1x128xf32>
    %136 = tpu.matmul %121, %6, %cst_40 {dimension_numbers = #tpu.dot_dimension_numbers<[1], [0], [0], [1], [0, 0, 1, 1], [], []>} : vector<1x32xf32>, vector<32x128xf32>, vector<1x128xf32> -> vector<1x128xf32>
    %137 = arith.addf %135, %136 : vector<1x128xf32>
    %138 = arith.negf %137 : vector<1x128xf32>
    %139 = math.exp %138 : vector<1x128xf32>
    %cst_41 = arith.constant 1.000000e+00 : f32
    %140 = vector.broadcast %cst_41 : f32 to vector<1x128xf32>
    %141 = arith.addf %140, %139 : vector<1x128xf32>
    %142 = arith.divf %140, %141 : vector<1x128xf32>
    %143 = math.tanh %137 : vector<1x128xf32>
    %144 = vector.extract_strided_slice %142 {offsets = [0, 0], sizes = [1, 32], strides = [1, 1]} : vector<1x128xf32> to vector<1x32xf32>
    %145 = vector.extract_strided_slice %142 {offsets = [0, 32], sizes = [1, 32], strides = [1, 1]} : vector<1x128xf32> to vector<1x32xf32>
    %146 = vector.extract_strided_slice %143 {offsets = [0, 64], sizes = [1, 32], strides = [1, 1]} : vector<1x128xf32> to vector<1x32xf32>
    %147 = vector.extract_strided_slice %142 {offsets = [0, 96], sizes = [1, 32], strides = [1, 1]} : vector<1x128xf32> to vector<1x32xf32>
    %148 = arith.mulf %145, %119 : vector<1x32xf32>
    %149 = arith.mulf %144, %146 : vector<1x32xf32>
    %150 = arith.addf %148, %149 : vector<1x32xf32>
    %151 = math.tanh %150 : vector<1x32xf32>
    %152 = arith.mulf %147, %151 : vector<1x32xf32>
    %cst_42 = arith.constant dense<0.000000e+00> : vector<1x128xf32>
    %153 = tpu.matmul %152, %7, %cst_42 {dimension_numbers = #tpu.dot_dimension_numbers<[1], [0], [0], [1], [0, 0, 1, 1], [], []>} : vector<1x32xf32>, vector<32x128xf32>, vector<1x128xf32> -> vector<1x128xf32>
    %154 = arith.addf %153, %8 : vector<1x128xf32>
    %cst_43 = arith.constant dense<0xFF800000> : vector<1xf32>
    %155 = vector.multi_reduction <maximumf>, %154, %cst_43 [1] : vector<1x128xf32> to vector<1xf32>
    %156 = vector.shape_cast %155 : vector<1xf32> to vector<1x1xf32>
    %157 = vector.broadcast %156 : vector<1x1xf32> to vector<1x128xf32>
    %158 = arith.subf %154, %157 : vector<1x128xf32>
    %159 = math.exp %158 : vector<1x128xf32>
    %cst_44 = arith.constant dense<0.000000e+00> : vector<1xf32>
    %160 = vector.multi_reduction <add>, %159, %cst_44 [1] : vector<1x128xf32> to vector<1xf32>
    %161 = vector.shape_cast %160 : vector<1xf32> to vector<1x1xf32>
    %162 = math.log %161 : vector<1x1xf32>
    %163 = vector.broadcast %162 : vector<1x1xf32> to vector<1x128xf32>
    %164 = arith.subf %158, %163 : vector<1x128xf32>
    %c4 = arith.constant 4 : index
    %c0_45 = arith.constant 0 : index
    %165 = vector.load %arg8[%c4, %c0_45] : memref<8x128xf32, #tpu.memory_space<vmem>>, vector<1x128xf32>
    tpu.vector_store %arg8[%c4, %c0_45], %164 {strides = array<i32>} : memref<8x128xf32, #tpu.memory_space<vmem>>, vector<1x128xf32>,
    %166 = vector.extract_strided_slice %5 {offsets = [5, 0], sizes = [1, 128], strides = [1, 1]} : vector<8x128xf32> to vector<1x128xf32>
    %cst_46 = arith.constant dense<0.000000e+00> : vector<1x128xf32>
    %167 = tpu.matmul %152, %6, %cst_46 {dimension_numbers = #tpu.dot_dimension_numbers<[1], [0], [0], [1], [0, 0, 1, 1], [], []>} : vector<1x32xf32>, vector<32x128xf32>, vector<1x128xf32> -> vector<1x128xf32>
    %168 = arith.addf %166, %167 : vector<1x128xf32>
    %169 = arith.negf %168 : vector<1x128xf32>
    %170 = math.exp %169 : vector<1x128xf32>
    %cst_47 = arith.constant 1.000000e+00 : f32
    %171 = vector.broadcast %cst_47 : f32 to vector<1x128xf32>
    %172 = arith.addf %171, %170 : vector<1x128xf32>
    %173 = arith.divf %171, %172 : vector<1x128xf32>
    %174 = math.tanh %168 : vector<1x128xf32>
    %175 = vector.extract_strided_slice %173 {offsets = [0, 0], sizes = [1, 32], strides = [1, 1]} : vector<1x128xf32> to vector<1x32xf32>
    %176 = vector.extract_strided_slice %173 {offsets = [0, 32], sizes = [1, 32], strides = [1, 1]} : vector<1x128xf32> to vector<1x32xf32>
    %177 = vector.extract_strided_slice %174 {offsets = [0, 64], sizes = [1, 32], strides = [1, 1]} : vector<1x128xf32> to vector<1x32xf32>
    %178 = vector.extract_strided_slice %173 {offsets = [0, 96], sizes = [1, 32], strides = [1, 1]} : vector<1x128xf32> to vector<1x32xf32>
    %179 = arith.mulf %176, %150 : vector<1x32xf32>
    %180 = arith.mulf %175, %177 : vector<1x32xf32>
    %181 = arith.addf %179, %180 : vector<1x32xf32>
    %182 = math.tanh %181 : vector<1x32xf32>
    %183 = arith.mulf %178, %182 : vector<1x32xf32>
    %cst_48 = arith.constant dense<0.000000e+00> : vector<1x128xf32>
    %184 = tpu.matmul %183, %7, %cst_48 {dimension_numbers = #tpu.dot_dimension_numbers<[1], [0], [0], [1], [0, 0, 1, 1], [], []>} : vector<1x32xf32>, vector<32x128xf32>, vector<1x128xf32> -> vector<1x128xf32>
    %185 = arith.addf %184, %8 : vector<1x128xf32>
    %cst_49 = arith.constant dense<0xFF800000> : vector<1xf32>
    %186 = vector.multi_reduction <maximumf>, %185, %cst_49 [1] : vector<1x128xf32> to vector<1xf32>
    %187 = vector.shape_cast %186 : vector<1xf32> to vector<1x1xf32>
    %188 = vector.broadcast %187 : vector<1x1xf32> to vector<1x128xf32>
    %189 = arith.subf %185, %188 : vector<1x128xf32>
    %190 = math.exp %189 : vector<1x128xf32>
    %cst_50 = arith.constant dense<0.000000e+00> : vector<1xf32>
    %191 = vector.multi_reduction <add>, %190, %cst_50 [1] : vector<1x128xf32> to vector<1xf32>
    %192 = vector.shape_cast %191 : vector<1xf32> to vector<1x1xf32>
    %193 = math.log %192 : vector<1x1xf32>
    %194 = vector.broadcast %193 : vector<1x1xf32> to vector<1x128xf32>
    %195 = arith.subf %189, %194 : vector<1x128xf32>
    %c5 = arith.constant 5 : index
    %c0_51 = arith.constant 0 : index
    %196 = vector.load %arg8[%c5, %c0_51] : memref<8x128xf32, #tpu.memory_space<vmem>>, vector<1x128xf32>
    tpu.vector_store %arg8[%c5, %c0_51], %195 {strides = array<i32>} : memref<8x128xf32, #tpu.memory_space<vmem>>, vector<1x128xf32>,
    %197 = vector.extract_strided_slice %5 {offsets = [6, 0], sizes = [1, 128], strides = [1, 1]} : vector<8x128xf32> to vector<1x128xf32>
    %cst_52 = arith.constant dense<0.000000e+00> : vector<1x128xf32>
    %198 = tpu.matmul %183, %6, %cst_52 {dimension_numbers = #tpu.dot_dimension_numbers<[1], [0], [0], [1], [0, 0, 1, 1], [], []>} : vector<1x32xf32>, vector<32x128xf32>, vector<1x128xf32> -> vector<1x128xf32>
    %199 = arith.addf %197, %198 : vector<1x128xf32>
    %200 = arith.negf %199 : vector<1x128xf32>
    %201 = math.exp %200 : vector<1x128xf32>
    %cst_53 = arith.constant 1.000000e+00 : f32
    %202 = vector.broadcast %cst_53 : f32 to vector<1x128xf32>
    %203 = arith.addf %202, %201 : vector<1x128xf32>
    %204 = arith.divf %202, %203 : vector<1x128xf32>
    %205 = math.tanh %199 : vector<1x128xf32>
    %206 = vector.extract_strided_slice %204 {offsets = [0, 0], sizes = [1, 32], strides = [1, 1]} : vector<1x128xf32> to vector<1x32xf32>
    %207 = vector.extract_strided_slice %204 {offsets = [0, 32], sizes = [1, 32], strides = [1, 1]} : vector<1x128xf32> to vector<1x32xf32>
    %208 = vector.extract_strided_slice %205 {offsets = [0, 64], sizes = [1, 32], strides = [1, 1]} : vector<1x128xf32> to vector<1x32xf32>
    %209 = vector.extract_strided_slice %204 {offsets = [0, 96], sizes = [1, 32], strides = [1, 1]} : vector<1x128xf32> to vector<1x32xf32>
    %210 = arith.mulf %207, %181 : vector<1x32xf32>
    %211 = arith.mulf %206, %208 : vector<1x32xf32>
    %212 = arith.addf %210, %211 : vector<1x32xf32>
    %213 = math.tanh %212 : vector<1x32xf32>
    %214 = arith.mulf %209, %213 : vector<1x32xf32>
    %cst_54 = arith.constant dense<0.000000e+00> : vector<1x128xf32>
    %215 = tpu.matmul %214, %7, %cst_54 {dimension_numbers = #tpu.dot_dimension_numbers<[1], [0], [0], [1], [0, 0, 1, 1], [], []>} : vector<1x32xf32>, vector<32x128xf32>, vector<1x128xf32> -> vector<1x128xf32>
    %216 = arith.addf %215, %8 : vector<1x128xf32>
    %cst_55 = arith.constant dense<0xFF800000> : vector<1xf32>
    %217 = vector.multi_reduction <maximumf>, %216, %cst_55 [1] : vector<1x128xf32> to vector<1xf32>
    %218 = vector.shape_cast %217 : vector<1xf32> to vector<1x1xf32>
    %219 = vector.broadcast %218 : vector<1x1xf32> to vector<1x128xf32>
    %220 = arith.subf %216, %219 : vector<1x128xf32>
    %221 = math.exp %220 : vector<1x128xf32>
    %cst_56 = arith.constant dense<0.000000e+00> : vector<1xf32>
    %222 = vector.multi_reduction <add>, %221, %cst_56 [1] : vector<1x128xf32> to vector<1xf32>
    %223 = vector.shape_cast %222 : vector<1xf32> to vector<1x1xf32>
    %224 = math.log %223 : vector<1x1xf32>
    %225 = vector.broadcast %224 : vector<1x1xf32> to vector<1x128xf32>
    %226 = arith.subf %220, %225 : vector<1x128xf32>
    %c6 = arith.constant 6 : index
    %c0_57 = arith.constant 0 : index
    %227 = vector.load %arg8[%c6, %c0_57] : memref<8x128xf32, #tpu.memory_space<vmem>>, vector<1x128xf32>
    tpu.vector_store %arg8[%c6, %c0_57], %226 {strides = array<i32>} : memref<8x128xf32, #tpu.memory_space<vmem>>, vector<1x128xf32>,
    %228 = vector.extract_strided_slice %5 {offsets = [7, 0], sizes = [1, 128], strides = [1, 1]} : vector<8x128xf32> to vector<1x128xf32>
    %cst_58 = arith.constant dense<0.000000e+00> : vector<1x128xf32>
    %229 = tpu.matmul %214, %6, %cst_58 {dimension_numbers = #tpu.dot_dimension_numbers<[1], [0], [0], [1], [0, 0, 1, 1], [], []>} : vector<1x32xf32>, vector<32x128xf32>, vector<1x128xf32> -> vector<1x128xf32>
    %230 = arith.addf %228, %229 : vector<1x128xf32>
    %231 = arith.negf %230 : vector<1x128xf32>
    %232 = math.exp %231 : vector<1x128xf32>
    %cst_59 = arith.constant 1.000000e+00 : f32
    %233 = vector.broadcast %cst_59 : f32 to vector<1x128xf32>
    %234 = arith.addf %233, %232 : vector<1x128xf32>
    %235 = arith.divf %233, %234 : vector<1x128xf32>
    %236 = math.tanh %230 : vector<1x128xf32>
    %237 = vector.extract_strided_slice %235 {offsets = [0, 0], sizes = [1, 32], strides = [1, 1]} : vector<1x128xf32> to vector<1x32xf32>
    %238 = vector.extract_strided_slice %235 {offsets = [0, 32], sizes = [1, 32], strides = [1, 1]} : vector<1x128xf32> to vector<1x32xf32>
    %239 = vector.extract_strided_slice %236 {offsets = [0, 64], sizes = [1, 32], strides = [1, 1]} : vector<1x128xf32> to vector<1x32xf32>
    %240 = vector.extract_strided_slice %235 {offsets = [0, 96], sizes = [1, 32], strides = [1, 1]} : vector<1x128xf32> to vector<1x32xf32>
    %241 = arith.mulf %238, %212 : vector<1x32xf32>
    %242 = arith.mulf %237, %239 : vector<1x32xf32>
    %243 = arith.addf %241, %242 : vector<1x32xf32>
    %244 = math.tanh %243 : vector<1x32xf32>
    %245 = arith.mulf %240, %244 : vector<1x32xf32>
    %cst_60 = arith.constant dense<0.000000e+00> : vector<1x128xf32>
    %246 = tpu.matmul %245, %7, %cst_60 {dimension_numbers = #tpu.dot_dimension_numbers<[1], [0], [0], [1], [0, 0, 1, 1], [], []>} : vector<1x32xf32>, vector<32x128xf32>, vector<1x128xf32> -> vector<1x128xf32>
    %247 = arith.addf %246, %8 : vector<1x128xf32>
    %cst_61 = arith.constant dense<0xFF800000> : vector<1xf32>
    %248 = vector.multi_reduction <maximumf>, %247, %cst_61 [1] : vector<1x128xf32> to vector<1xf32>
    %249 = vector.shape_cast %248 : vector<1xf32> to vector<1x1xf32>
    %250 = vector.broadcast %249 : vector<1x1xf32> to vector<1x128xf32>
    %251 = arith.subf %247, %250 : vector<1x128xf32>
    %252 = math.exp %251 : vector<1x128xf32>
    %cst_62 = arith.constant dense<0.000000e+00> : vector<1xf32>
    %253 = vector.multi_reduction <add>, %252, %cst_62 [1] : vector<1x128xf32> to vector<1xf32>
    %254 = vector.shape_cast %253 : vector<1xf32> to vector<1x1xf32>
    %255 = math.log %254 : vector<1x1xf32>
    %256 = vector.broadcast %255 : vector<1x1xf32> to vector<1x128xf32>
    %257 = arith.subf %251, %256 : vector<1x128xf32>
    %c7 = arith.constant 7 : index
    %c0_63 = arith.constant 0 : index
    %258 = vector.load %arg8[%c7, %c0_63] : memref<8x128xf32, #tpu.memory_space<vmem>>, vector<1x128xf32>
    tpu.vector_store %arg8[%c7, %c0_63], %257 {strides = array<i32>} : memref<8x128xf32, #tpu.memory_space<vmem>>, vector<1x128xf32>,
    %c0_64 = arith.constant 0 : index
    %c0_65 = arith.constant 0 : index
    %259 = vector.load %arg9[%c0_64, %c0_65] : memref<1x32xf32, #tpu.memory_space<vmem>>, vector<1x32xf32>
    tpu.vector_store %arg9[%c0_64, %c0_65], %245 {strides = array<i32>} : memref<1x32xf32, #tpu.memory_space<vmem>>, vector<1x32xf32>,
    %c0_66 = arith.constant 0 : index
    %c0_67 = arith.constant 0 : index
    %260 = vector.load %arg10[%c0_66, %c0_67] : memref<1x32xf32, #tpu.memory_space<vmem>>, vector<1x32xf32>
    tpu.vector_store %arg10[%c0_66, %c0_67], %243 {strides = array<i32>} : memref<1x32xf32, #tpu.memory_space<vmem>>, vector<1x32xf32>,
    return
  }
}

</mosaic_0001>

<llo_original>
// kernel: tpu_custom_call.1
$region0: #{tpu_custom_call.1}
  #allocation0 [shape = 'u32[]', space=smem, size = 0x4, offset = 0x4, fixed_abs, tag = 'smem constant byte address 0x4 - core index']
  #allocation1 [shape = 'u32[144,128]{1,0:T(1,128)}', space=vmem, size = 0x12000, scoped, tag = 'internal scratch']
  %s0 = inlined_call_operand.hbm [shape: f32[8,128], index: 0, kind: input, shape index: {}]
  %s1 = inlined_call_operand.vmem [shape: f32[1,32], index: 1, kind: input, shape index: {}]
  %s2 = inlined_call_operand.vmem [shape: f32[1,32], index: 2, kind: input, shape index: {}]
  %s3 = inlined_call_operand.hbm [shape: f32[128,128], index: 3, kind: input, shape index: {}]
  %s4 = inlined_call_operand.vmem [shape: f32[1,128], index: 4, kind: input, shape index: {}]
  %s5 = inlined_call_operand.hbm [shape: f32[32,128], index: 5, kind: input, shape index: {}]
  %s6 = inlined_call_operand.hbm [shape: f32[32,128], index: 6, kind: input, shape index: {}]
  %s7 = inlined_call_operand.vmem [shape: f32[1,128], index: 7, kind: input, shape index: {}]
  %s8 = inlined_call_operand.hbm [shape: f32[8,128], index: 8, kind: output, shape index: {0}]
  %s9 = inlined_call_operand.hbm [shape: f32[1,32], index: 9, kind: output, shape index: {1}]
  %s10 = inlined_call_operand.hbm [shape: f32[1,32], index: 10, kind: output, shape index: {2}]
  %11 = xla_tuple %s8, %s9, %s10
  %s12 = sld [smem:[#allocation0]]
  $region74: #{tpu_custom_call.1} parent=0
    _
  %s14 = ssub.s32 1, %s12
  %s15 = scalar_select 0, %s14, %s12
  $region1: #{tpu_custom_call.1} parent=0
    #allocation2 [shape = 'u8[4096]{0}', space=vmem, size = 0x1000, scoped, tag = 'input window, operand 0, single buffered']
    #allocation3 [shape = 's32[1]{0}', space=sflag, size = 0x4, scoped, tag = 'scoped memory for tpu_custom_call.1']
    #allocation4 [shape = 's32[1]{0}', space=sflag, size = 0x4, scoped, tag = 'scoped memory for tpu_custom_call.1']
    #allocation5 [shape = 'u8[65536]{0}', space=vmem, size = 0x10000, scoped, tag = 'input window, operand 3, single buffered']
    #allocation6 [shape = 's32[1]{0}', space=sflag, size = 0x4, scoped, tag = 'scoped memory for tpu_custom_call.1']
    #allocation7 [shape = 'u8[16384]{0}', space=vmem, size = 0x4000, scoped, tag = 'input window, operand 5, single buffered']
    #allocation8 [shape = 'u8[16384]{0}', space=vmem, size = 0x4000, scoped, tag = 'input window, operand 6, single buffered']
    #allocation9 [shape = 's32[1]{0}', space=sflag, size = 0x4, scoped, tag = 'scoped memory for tpu_custom_call.1']
    #allocation10 [shape = 'u8[4096]{0}', space=vmem, size = 0x1000, scoped, tag = 'output window, operand 0, single buffered']
    #allocation11 [shape = 'u8[512]{0}', space=vmem, size = 0x400, scoped, tag = 'output window, operand 1, single buffered']
    #allocation12 [shape = 's32[1]{0}', space=sflag, size = 0x4, scoped, tag = 'scoped memory for tpu_custom_call.1']
    #allocation13 [shape = 'u8[512]{0}', space=vmem, size = 0x400, scoped, tag = 'output window, operand 2, single buffered']
    %16 = vsyncpa [#allocation3], 0
    %17 = vsyncpa [#allocation6], 0
    %18 = vsyncpa [#allocation9], 0
    %19 = vsyncpa [#allocation4], 0
    %20 = vsyncpa [#allocation12], 0
    // Predicated region
    $region2: #{tpu_custom_call.1} parent=1 // pred_check
      _
    $region3: #{tpu_custom_call.1} parent=1 // pred_check_branch
      %22 = sbr.rel (0) target = $region5
    $region4: #{tpu_custom_call.1} parent=1 // pred_region
      %s24 = ssub.s32 128, 128
      %25 = vsyncadd [#allocation3], %s24
      %s27 = sshll.u32 [#allocation2], 4
      %s28 = int_to_ptr.vmem [resolvable:$true] %s27
      %30 = dma.hbm_to_vmem [thread:$0]  %s0, 128, %s28, [#allocation3]
    $region5: #{tpu_custom_call.1} parent=1 // pred_fallthru
      _
    // Predicated region
    $region6: #{tpu_custom_call.1} parent=1 // pred_check
      _
    $region7: #{tpu_custom_call.1} parent=1 // pred_check_branch
      %32 = sbr.rel (0) target = $region9
    $region8: #{tpu_custom_call.1} parent=1 // pred_region
      _
    $region9: #{tpu_custom_call.1} parent=1 // pred_fallthru
      _
    // Predicated region
    $region10: #{tpu_custom_call.1} parent=1 // pred_check
      _
    $region11: #{tpu_custom_call.1} parent=1 // pred_check_branch
      %34 = sbr.rel (0) target = $region13
    $region12: #{tpu_custom_call.1} parent=1 // pred_region
      _
    $region13: #{tpu_custom_call.1} parent=1 // pred_fallthru
      _
    // Predicated region
    $region14: #{tpu_custom_call.1} parent=1 // pred_check
      _
    $region15: #{tpu_custom_call.1} parent=1 // pred_check_branch
      %36 = sbr.rel (0) target = $region17
    $region16: #{tpu_custom_call.1} parent=1 // pred_region
      %s38 = ssub.s32 2048, 2048
      %39 = vsyncadd [#allocation6], %s38
      %s40 = sshll.u32 [#allocation5], 4
      %s41 = int_to_ptr.vmem [resolvable:$true] %s40
      %46 = dma.hbm_to_vmem [thread:$0]  %s3, 2048, %s41, [#allocation6], 128, 128, 8
    $region17: #{tpu_custom_call.1} parent=1 // pred_fallthru
      _
    // Predicated region
    $region18: #{tpu_custom_call.1} parent=1 // pred_check
      _
    $region19: #{tpu_custom_call.1} parent=1 // pred_check_branch
      %48 = sbr.rel (0) target = $region21
    $region20: #{tpu_custom_call.1} parent=1 // pred_region
      _
    $region21: #{tpu_custom_call.1} parent=1 // pred_fallthru
      _
    // Predicated region
    $region22: #{tpu_custom_call.1} parent=1 // pred_check
      _
    $region23: #{tpu_custom_call.1} parent=1 // pred_check_branch
      %50 = sbr.rel (0) target = $region25
    $region24: #{tpu_custom_call.1} parent=1 // pred_region
      %s52 = ssub.s32 512, 512
      %53 = vsyncadd [#allocation6], %s52
      %s54 = sshll.u32 [#allocation7], 4
      %s55 = int_to_ptr.vmem [resolvable:$true] %s54
      %60 = dma.hbm_to_vmem [thread:$0]  %s5, 512, %s55, [#allocation6], 128, 128, 8
    $region25: #{tpu_custom_call.1} parent=1 // pred_fallthru
      _
    // Predicated region
    $region26: #{tpu_custom_call.1} parent=1 // pred_check
      _
    $region27: #{tpu_custom_call.1} parent=1 // pred_check_branch
      %62 = sbr.rel (0) target = $region29
    $region28: #{tpu_custom_call.1} parent=1 // pred_region
      %s64 = ssub.s32 512, 512
      %65 = vsyncadd [#allocation9], %s64
      %s66 = sshll.u32 [#allocation8], 4
      %s67 = int_to_ptr.vmem [resolvable:$true] %s66
      %72 = dma.hbm_to_vmem [thread:$0]  %s6, 512, %s67, [#allocation9], 128, 128, 8
    $region29: #{tpu_custom_call.1} parent=1 // pred_fallthru
      _
    // Predicated region
    $region30: #{tpu_custom_call.1} parent=1 // pred_check
      _
    $region31: #{tpu_custom_call.1} parent=1 // pred_check_branch
      %74 = sbr.rel (0) target = $region33
    $region32: #{tpu_custom_call.1} parent=1 // pred_region
      _
    $region33: #{tpu_custom_call.1} parent=1 // pred_fallthru
      _
    // Predicated region
    $region34: #{tpu_custom_call.1} parent=1 // pred_check
      _
    $region35: #{tpu_custom_call.1} parent=1 // pred_check_branch
      %76 = sbr.rel (0) target = $region37
    $region36: #{tpu_custom_call.1} parent=1 // pred_region
      %77 = dma.done [#allocation3], 128
    $region37: #{tpu_custom_call.1} parent=1 // pred_fallthru
      _
    // Predicated region
    $region38: #{tpu_custom_call.1} parent=1 // pred_check
      _
    $region39: #{tpu_custom_call.1} parent=1 // pred_check_branch
      %79 = sbr.rel (0) target = $region41
    $region40: #{tpu_custom_call.1} parent=1 // pred_region
      %80 = dma.done [#allocation6], 2048
    $region41: #{tpu_custom_call.1} parent=1 // pred_fallthru
      _
    // Predicated region
    $region42: #{tpu_custom_call.1} parent=1 // pred_check
      _
    $region43: #{tpu_custom_call.1} parent=1 // pred_check_branch
      %82 = sbr.rel (0) target = $region45
    $region44: #{tpu_custom_call.1} parent=1 // pred_region
      %83 = dma.done [#allocation6], 512
    $region45: #{tpu_custom_call.1} parent=1 // pred_fallthru
      _
    // Predicated region
    $region46: #{tpu_custom_call.1} parent=1 // pred_check
      _
    $region47: #{tpu_custom_call.1} parent=1 // pred_check_branch
      %85 = sbr.rel (0) target = $region49
    $region48: #{tpu_custom_call.1} parent=1 // pred_region
      %86 = dma.done [#allocation9], 512
    $region49: #{tpu_custom_call.1} parent=1 // pred_fallthru
      _
    %v87 = vld [vmem:[#allocation2] sm:$0xff]
    %v88 = vld [vmem:[#allocation5] sm:$0xff]
    %v89 = vld [vmem:[#allocation5 + $0x8] sm:$0xff]
    %v90 = vld [vmem:[#allocation5 + $0x10] sm:$0xff]
    %v91 = vld [vmem:[#allocation5 + $0x18] sm:$0xff]
    %v92 = vld [vmem:[#allocation5 + $0x20] sm:$0xff]
    %v93 = vld [vmem:[#allocation5 + $0x28] sm:$0xff]
    %v94 = vld [vmem:[#allocation5 + $0x30] sm:$0xff]
    %v95 = vld [vmem:[#allocation5 + $0x38] sm:$0xff]
    %v96 = vld [vmem:[#allocation5 + $0x40] sm:$0xff]
    %v97 = vld [vmem:[#allocation5 + $0x48] sm:$0xff]
    %v98 = vld [vmem:[#allocation5 + $0x50] sm:$0xff]
    %v99 = vld [vmem:[#allocation5 + $0x58] sm:$0xff]
    %v100 = vld [vmem:[#allocation5 + $0x60] sm:$0xff]
    %v101 = vld [vmem:[#allocation5 + $0x68] sm:$0xff]
    %v102 = vld [vmem:[#allocation5 + $0x70] sm:$0xff]
    %v103 = vld [vmem:[#allocation5 + $0x78] sm:$0xff]
    %v104 = vld [vmem:[%s4] sm:$0x1]
    %v106 = vlaneseq
    %v107 = vshrl.u32 %v106, 7
    %v108 = vsub.s32 0, %v107
    %v109 = vrot.slane %v104, %v108
    %111 = vmatprep.subr.mxu0 0.0
    %112 = vmatpush1.msra.mxu0 %v88
    %113 = vmatprep.subr.mxu0 0.0
    %114 = vmatpush1.msra.mxu0 %v89
    %115 = vmatprep.subr.mxu0 0.0
    %116 = vmatpush1.msra.mxu0 %v90
    %117 = vmatprep.subr.mxu0 0.0
    %118 = vmatpush1.msra.mxu0 %v91
    %119 = vmatprep.subr.mxu0 0.0
    %120 = vmatpush1.msra.mxu0 %v92
    %121 = vmatprep.subr.mxu0 0.0
    %122 = vmatpush1.msra.mxu0 %v93
    %123 = vmatprep.subr.mxu0 0.0
    %124 = vmatpush1.msra.mxu0 %v94
    %125 = vmatprep.subr.mxu0 0.0
    %126 = vmatpush1.msra.mxu0 %v95
    %127 = vmatprep.subr.mxu0 0.0
    %128 = vmatpush1.msra.mxu0 %v96
    %129 = vmatprep.subr.mxu0 0.0
    %130 = vmatpush1.msra.mxu0 %v97
    %131 = vmatprep.subr.mxu0 0.0
    %132 = vmatpush1.msra.mxu0 %v98
    %133 = vmatprep.subr.mxu0 0.0
    %134 = vmatpush1.msra.mxu0 %v99
    %135 = vmatprep.subr.mxu0 0.0
    %136 = vmatpush1.msra.mxu0 %v100
    %137 = vmatprep.subr.mxu0 0.0
    %138 = vmatpush1.msra.mxu0 %v101
    %139 = vmatprep.subr.mxu0 0.0
    %140 = vmatpush1.msra.mxu0 %v102
    %141 = vmatprep.subr.mxu0 0.0
    %142 = vmatpush1.msra.mxu0 %v103
    %143 = vmatprep.subr.mxu0 0.0
    %144 = vmatpush1.msra.mxu0 0.0
    %145 = vmatprep.subr.mxu0 0.0
    %146 = vmatpush1.msra.mxu0 0.0
    %147 = vmatprep.subr.mxu0 0.0
    %148 = vmatpush1.msra.mxu0 0.0
    %149 = vmatprep.subr.mxu0 0.0
    %150 = vmatpush1.msra.mxu0 0.0
    %151 = vmatprep.subr.mxu0 0.0
    %152 = vmatpush1.msra.mxu0 0.0
    %153 = vmatprep.subr.mxu0 0.0
    %154 = vmatpush1.msra.mxu0 0.0
    %155 = vmatprep.subr.mxu0 0.0
    %156 = vmatpush1.msra.mxu0 0.0
    %157 = vmatprep.subr.mxu0 0.0
    %158 = vmatpush1.msra.mxu0 0.0
    %159 = vmatprep.subr.mxu0 0.0
    %160 = vmatpush1.msra.mxu0 0.0
    %161 = vmatprep.subr.mxu0 0.0
    %162 = vmatpush1.msra.mxu0 0.0
    %163 = vmatprep.subr.mxu0 0.0
    %164 = vmatpush1.msra.mxu0 0.0
    %165 = vmatprep.subr.mxu0 0.0
    %166 = vmatpush1.msra.mxu0 0.0
    %167 = vmatprep.subr.mxu0 0.0
    %168 = vmatpush1.msra.mxu0 0.0
    %169 = vmatprep.subr.mxu0 0.0
    %170 = vmatpush1.msra.mxu0 0.0
    %171 = vmatprep.subr.mxu0 0.0
    %172 = vmatpush1.msra.mxu0 0.0
    %173 = vmatprep.subr.mxu0 0.0
    %174 = vmatpush1.msra.mxu0 0.0
    %175 = vmatprep.mubr.f32.mxu0 0.0
    %176 = vmatmul.mubr.f32.gmra.mrb[0].mxu0 %v87
    %v177 = vpop.f32.mrb[0].mxu0
    %v178 = vadd.f32 %v109, %v177
    %v179 = vpop.f32.mrb[0].mxu0
    %180 = vdwg.mxu0
    %v181 = vld [vmem:[#allocation7] sm:$0xff]
    %v182 = vld [vmem:[#allocation7 + $0x8] sm:$0xff]
    %v183 = vld [vmem:[#allocation7 + $0x10] sm:$0xff]
    %v184 = vld [vmem:[#allocation7 + $0x18] sm:$0xff]
    %v185 = vld [vmem:[#allocation8] sm:$0xff]
    %v186 = vld [vmem:[#allocation8 + $0x8] sm:$0xff]
    %v187 = vld [vmem:[#allocation8 + $0x10] sm:$0xff]
    %v188 = vld [vmem:[#allocation8 + $0x18] sm:$0xff]
    %v189 = vld [vmem:[%s7] sm:$0x1]
    %v190 = vld [vmem:[%s1] sm:$0x1]
    %v191 = vld [vmem:[%s2] sm:$0x1]
    %vm192 = vcmask 261120
    %v194 = vsel %vm192, %v190, 0
    %196 = vmatprep.subr.mxu0 0.0
    %197 = vmatpush1.msra.mxu0 %v181
    %198 = vmatprep.subr.mxu0 0.0
    %199 = vmatpush1.msra.mxu0 %v182
    %200 = vmatprep.subr.mxu0 0.0
    %201 = vmatpush1.msra.mxu0 %v183
    %202 = vmatprep.subr.mxu0 0.0
    %203 = vmatpush1.msra.mxu0 %v184
    %204 = vmatprep.subr.mxu0 0.0
    %205 = vmatpush1.msra.mxu0 0.0
    %206 = vmatprep.subr.mxu0 0.0
    %207 = vmatpush1.msra.mxu0 0.0
    %208 = vmatprep.subr.mxu0 0.0
    %209 = vmatpush1.msra.mxu0 0.0
    %210 = vmatprep.subr.mxu0 0.0
    %211 = vmatpush1.msra.mxu0 0.0
    %212 = vmatprep.subr.mxu0 0.0
    %213 = vmatpush1.msra.mxu0 0.0
    %214 = vmatprep.subr.mxu0 0.0
    %215 = vmatpush1.msra.mxu0 0.0
    %216 = vmatprep.subr.mxu0 0.0
    %217 = vmatpush1.msra.mxu0 0.0
    %218 = vmatprep.subr.mxu0 0.0
    %219 = vmatpush1.msra.mxu0 0.0
    %220 = vmatprep.subr.mxu0 0.0
    %221 = vmatpush1.msra.mxu0 0.0
    %222 = vmatprep.subr.mxu0 0.0
    %223 = vmatpush1.msra.mxu0 0.0
    %224 = vmatprep.subr.mxu0 0.0
    %225 = vmatpush1.msra.mxu0 0.0
    %226 = vmatprep.subr.mxu0 0.0
    %227 = vmatpush1.msra.mxu0 0.0
    %228 = vmatprep.subr.mxu0 0.0
    %229 = vmatpush1.msra.mxu0 0.0
    %230 = vmatprep.subr.mxu0 0.0
    %231 = vmatpush1.msra.mxu0 0.0
    %232 = vmatprep.subr.mxu0 0.0
    %233 = vmatpush1.msra.mxu0 0.0
    %234 = vmatprep.subr.mxu0 0.0
    %235 = vmatpush1.msra.mxu0 0.0
    %236 = vmatprep.subr.mxu0 0.0
    %237 = vmatpush1.msra.mxu0 0.0
    %238 = vmatprep.subr.mxu0 0.0
    %239 = vmatpush1.msra.mxu0 0.0
    %240 = vmatprep.subr.mxu0 0.0
    %241 = vmatpush1.msra.mxu0 0.0
    %242 = vmatprep.subr.mxu0 0.0
    %243 = vmatpush1.msra.mxu0 0.0
    %244 = vmatprep.subr.mxu0 0.0
    %245 = vmatpush1.msra.mxu0 0.0
    %246 = vmatprep.subr.mxu0 0.0
    %247 = vmatpush1.msra.mxu0 0.0
    %248 = vmatprep.subr.mxu0 0.0
    %249 = vmatpush1.msra.mxu0 0.0
    %250 = vmatprep.subr.mxu0 0.0
    %251 = vmatpush1.msra.mxu0 0.0
    %252 = vmatprep.subr.mxu0 0.0
    %253 = vmatpush1.msra.mxu0 0.0
    %254 = vmatprep.subr.mxu0 0.0
    %255 = vmatpush1.msra.mxu0 0.0
    %256 = vmatprep.subr.mxu0 0.0
    %257 = vmatpush1.msra.mxu0 0.0
    %258 = vmatprep.subr.mxu0 0.0
    %259 = vmatpush1.msra.mxu0 0.0
    %260 = vmatprep.mubr.f32.mxu0 0.0
    %261 = vmatmul.mubr.f32.gmra.mrb[0].mxu0 %v194
    %v262 = vpop.f32.mrb[0].mxu0
    %v263 = vadd.f32 0.0, %v262
    %v264 = vpop.f32.mrb[0].mxu0
    %265 = vdwg.mxu0
    %v266 = vadd.f32 %v178, %v263
    %v267 = vxor.u32 %v266, 2147483648
    %v268 = vmul.f32 %v267, 1.442695
    %v269 = vpow.pop %v268
    %v270 = vadd.f32 %v269, 1.0
    %v271 = vrcp.pop %v270
    %v272 = vmul.f32 1.0, %v271
    %v273 = vtanh.pop %v266
    %v275 = vlaneseq
    %v276 = vshrl.u32 %v275, 7
    %v277 = vsub.s32 0, %v276
    %v278 = vrot.slane %v191, %v277
    %279 = vrot.lane.b32.xlu0 %v278, 32
    %v280 = vpop.permute.xlu0 %279
    %v282 = vmul.f32 %v272, %v280
    %284 = vrot.lane.b32.xlu0 %v273, 64
    %v285 = vpop.permute.xlu0 %284
    %v287 = vmul.f32 %v272, %v285
    %289 = vrot.lane.b32.xlu0 %v287, 32
    %v290 = vpop.permute.xlu0 %289
    %v292 = vadd.f32 %v282, %v290
    %v293 = vtanh.pop %v292
    %295 = vrot.lane.b32.xlu0 %v293, 64
    %v296 = vpop.permute.xlu0 %295
    %v298 = vmul.f32 %v272, %v296
    %300 = vrot.lane.b32.xlu0 %v298, 32
    %v301 = vpop.permute.xlu0 %300
    %v302 = vsel %vm192, %v301, 0
    %304 = vmatprep.subr.mxu0 0.0
    %305 = vmatpush1.msra.mxu0 %v185
    %306 = vmatprep.subr.mxu0 0.0
    %307 = vmatpush1.msra.mxu0 %v186
    %308 = vmatprep.subr.mxu0 0.0
    %309 = vmatpush1.msra.mxu0 %v187
    %310 = vmatprep.subr.mxu0 0.0
    %311 = vmatpush1.msra.mxu0 %v188
    %312 = vmatprep.subr.mxu0 0.0
    %313 = vmatpush1.msra.mxu0 0.0
    %314 = vmatprep.subr.mxu0 0.0
    %315 = vmatpush1.msra.mxu0 0.0
    %316 = vmatprep.subr.mxu0 0.0
    %317 = vmatpush1.msra.mxu0 0.0
    %318 = vmatprep.subr.mxu0 0.0
    %319 = vmatpush1.msra.mxu0 0.0
    %320 = vmatprep.subr.mxu0 0.0
    %321 = vmatpush1.msra.mxu0 0.0
    %322 = vmatprep.subr.mxu0 0.0
    %323 = vmatpush1.msra.mxu0 0.0
    %324 = vmatprep.subr.mxu0 0.0
    %325 = vmatpush1.msra.mxu0 0.0
    %326 = vmatprep.subr.mxu0 0.0
    %327 = vmatpush1.msra.mxu0 0.0
    %328 = vmatprep.subr.mxu0 0.0
    %329 = vmatpush1.msra.mxu0 0.0
    %330 = vmatprep.subr.mxu0 0.0
    %331 = vmatpush1.msra.mxu0 0.0
    %332 = vmatprep.subr.mxu0 0.0
    %333 = vmatpush1.msra.mxu0 0.0
    %334 = vmatprep.subr.mxu0 0.0
    %335 = vmatpush1.msra.mxu0 0.0
    %336 = vmatprep.subr.mxu0 0.0
    %337 = vmatpush1.msra.mxu0 0.0
    %338 = vmatprep.subr.mxu0 0.0
    %339 = vmatpush1.msra.mxu0 0.0
    %340 = vmatprep.subr.mxu0 0.0
    %341 = vmatpush1.msra.mxu0 0.0
    %342 = vmatprep.subr.mxu0 0.0
    %343 = vmatpush1.msra.mxu0 0.0
    %344 = vmatprep.subr.mxu0 0.0
    %345 = vmatpush1.msra.mxu0 0.0
    %346 = vmatprep.subr.mxu0 0.0
    %347 = vmatpush1.msra.mxu0 0.0
    %348 = vmatprep.subr.mxu0 0.0
    %349 = vmatpush1.msra.mxu0 0.0
    %350 = vmatprep.subr.mxu0 0.0
    %351 = vmatpush1.msra.mxu0 0.0
    %352 = vmatprep.subr.mxu0 0.0
    %353 = vmatpush1.msra.mxu0 0.0
    %354 = vmatprep.subr.mxu0 0.0
    %355 = vmatpush1.msra.mxu0 0.0
    %356 = vmatprep.subr.mxu0 0.0
    %357 = vmatpush1.msra.mxu0 0.0
    %358 = vmatprep.subr.mxu0 0.0
    %359 = vmatpush1.msra.mxu0 0.0
    %360 = vmatprep.subr.mxu0 0.0
    %361 = vmatpush1.msra.mxu0 0.0
    %362 = vmatprep.subr.mxu0 0.0
    %363 = vmatpush1.msra.mxu0 0.0
    %364 = vmatprep.subr.mxu0 0.0
    %365 = vmatpush1.msra.mxu0 0.0
    %366 = vmatprep.subr.mxu0 0.0
    %367 = vmatpush1.msra.mxu0 0.0
    %368 = vmatprep.mubr.f32.mxu0 0.0
    %369 = vmatmul.mubr.f32.gmra.mrb[0].mxu0 %v302
    %v370 = vpop.f32.mrb[0].mxu0
    %v371 = vadd.f32 %v189, %v370
    %v372 = vpop.f32.mrb[0].mxu0
    %373 = vdwg.mxu0
    %vm374 = vcmask 1040384
    %v375 = vsel %vm374, %v371, -inf
    %376 = vmax.xlane.f32.xlu0 %v375
    %v377 = vpop.xlane.xlu0 %376
    %v378 = vsub.f32 %v371, %v377
    %v379 = vmul.f32 %v378, 1.442695
    %v380 = vpow.pop %v379
    %v381 = vsel %vm374, %v380, 0.0
    %382 = vadd.xlane.f32.xlu0 %v381
    %v383 = vpop.xlane.xlu0 %382
    %v384 = vlog2.pop %v383
    %v385 = vmul.f32 %v384, 0.6931472
    %v386 = vsub.f32 %v378, %v385
    %387 = vst [vmem:[#allocation10] sm:$0x1] %v386
    %388 = vmatprep.subr.mxu0 0.0
    %389 = vmatpush1.msra.mxu0 %v181
    %390 = vmatprep.subr.mxu0 0.0
    %391 = vmatpush1.msra.mxu0 %v182
    %392 = vmatprep.subr.mxu0 0.0
    %393 = vmatpush1.msra.mxu0 %v183
    %394 = vmatprep.subr.mxu0 0.0
    %395 = vmatpush1.msra.mxu0 %v184
    %396 = vmatprep.subr.mxu0 0.0
    %397 = vmatpush1.msra.mxu0 0.0
    %398 = vmatprep.subr.mxu0 0.0
    %399 = vmatpush1.msra.mxu0 0.0
    %400 = vmatprep.subr.mxu0 0.0
    %401 = vmatpush1.msra.mxu0 0.0
    %402 = vmatprep.subr.mxu0 0.0
    %403 = vmatpush1.msra.mxu0 0.0
    %404 = vmatprep.subr.mxu0 0.0
    %405 = vmatpush1.msra.mxu0 0.0
    %406 = vmatprep.subr.mxu0 0.0
    %407 = vmatpush1.msra.mxu0 0.0
    %408 = vmatprep.subr.mxu0 0.0
    %409 = vmatpush1.msra.mxu0 0.0
    %410 = vmatprep.subr.mxu0 0.0
    %411 = vmatpush1.msra.mxu0 0.0
    %412 = vmatprep.subr.mxu0 0.0
    %413 = vmatpush1.msra.mxu0 0.0
    %414 = vmatprep.subr.mxu0 0.0
    %415 = vmatpush1.msra.mxu0 0.0
    %416 = vmatprep.subr.mxu0 0.0
    %417 = vmatpush1.msra.mxu0 0.0
    %418 = vmatprep.subr.mxu0 0.0
    %419 = vmatpush1.msra.mxu0 0.0
    %420 = vmatprep.subr.mxu0 0.0
    %421 = vmatpush1.msra.mxu0 0.0
    %422 = vmatprep.subr.mxu0 0.0
    %423 = vmatpush1.msra.mxu0 0.0
    %424 = vmatprep.subr.mxu0 0.0
    %425 = vmatpush1.msra.mxu0 0.0
    %426 = vmatprep.subr.mxu0 0.0
    %427 = vmatpush1.msra.mxu0 0.0
    %428 = vmatprep.subr.mxu0 0.0
    %429 = vmatpush1.msra.mxu0 0.0
    %430 = vmatprep.subr.mxu0 0.0
    %431 = vmatpush1.msra.mxu0 0.0
    %432 = vmatprep.subr.mxu0 0.0
    %433 = vmatpush1.msra.mxu0 0.0
    %434 = vmatprep.subr.mxu0 0.0
    %435 = vmatpush1.msra.mxu0 0.0
    %436 = vmatprep.subr.mxu0 0.0
    %437 = vmatpush1.msra.mxu0 0.0
    %438 = vmatprep.subr.mxu0 0.0
    %439 = vmatpush1.msra.mxu0 0.0
    %440 = vmatprep.subr.mxu0 0.0
    %441 = vmatpush1.msra.mxu0 0.0
    %442 = vmatprep.subr.mxu0 0.0
    %443 = vmatpush1.msra.mxu0 0.0
    %444 = vmatprep.subr.mxu0 0.0
    %445 = vmatpush1.msra.mxu0 0.0
    %446 = vmatprep.subr.mxu0 0.0
    %447 = vmatpush1.msra.mxu0 0.0
    %448 = vmatprep.subr.mxu0 0.0
    %449 = vmatpush1.msra.mxu0 0.0
    %450 = vmatprep.subr.mxu0 0.0
    %451 = vmatpush1.msra.mxu0 0.0
    %452 = vmatprep.mubr.f32.mxu0 0.0
    %453 = vmatmul.mubr.f32.gmra.mrb[0].mxu0 %v302
    %v454 = vpop.f32.mrb[0].mxu0
    %v455 = vadd.f32 0.0, %v454
    %v456 = vpop.f32.mrb[0].mxu0
    %457 = vdwg.mxu0
    %v459 = vrot.slane %v455, 7
    %v461 = vadd.f32 %v178, %v459
    %v462 = vxor.u32 %v461, 2147483648
    %v463 = vmul.f32 %v462, 1.442695
    %v464 = vpow.pop %v463
    %v465 = vadd.f32 %v464, 1.0
    %v466 = vrcp.pop %v465
    %v467 = vmul.f32 1.0, %v466
    %v468 = vtanh.pop %v461
    %v470 = vrot.slane %v292, 7
    %v472 = vmul.f32 %v467, %v470
    %474 = vrot.lane.b32.xlu0 %v468, 64
    %v475 = vpop.permute.xlu0 %474
    %v477 = vmul.f32 %v467, %v475
    %479 = vrot.lane.b32.xlu0 %v477, 32
    %v480 = vpop.permute.xlu0 %479
    %v482 = vadd.f32 %v472, %v480
    %v483 = vtanh.pop %v482
    %485 = vrot.lane.b32.xlu0 %v483, 64
    %v486 = vpop.permute.xlu0 %485
    %v488 = vmul.f32 %v467, %v486
    %v490 = vrot.slane %v488, 1
    %491 = vrot.lane.b32.xlu0 %v490, 32
    %v492 = vpop.permute.xlu0 %491
    %v493 = vsel %vm192, %v492, 0
    %495 = vmatprep.subr.mxu0 0.0
    %496 = vmatpush1.msra.mxu0 %v185
    %497 = vmatprep.subr.mxu0 0.0
    %498 = vmatpush1.msra.mxu0 %v186
    %499 = vmatprep.subr.mxu0 0.0
    %500 = vmatpush1.msra.mxu0 %v187
    %501 = vmatprep.subr.mxu0 0.0
    %502 = vmatpush1.msra.mxu0 %v188
    %503 = vmatprep.subr.mxu0 0.0
    %504 = vmatpush1.msra.mxu0 0.0
    %505 = vmatprep.subr.mxu0 0.0
    %506 = vmatpush1.msra.mxu0 0.0
    %507 = vmatprep.subr.mxu0 0.0
    %508 = vmatpush1.msra.mxu0 0.0
    %509 = vmatprep.subr.mxu0 0.0
    %510 = vmatpush1.msra.mxu0 0.0
    %511 = vmatprep.subr.mxu0 0.0
    %512 = vmatpush1.msra.mxu0 0.0
    %513 = vmatprep.subr.mxu0 0.0
    %514 = vmatpush1.msra.mxu0 0.0
    %515 = vmatprep.subr.mxu0 0.0
    %516 = vmatpush1.msra.mxu0 0.0
    %517 = vmatprep.subr.mxu0 0.0
    %518 = vmatpush1.msra.mxu0 0.0
    %519 = vmatprep.subr.mxu0 0.0
    %520 = vmatpush1.msra.mxu0 0.0
    %521 = vmatprep.subr.mxu0 0.0
    %522 = vmatpush1.msra.mxu0 0.0
    %523 = vmatprep.subr.mxu0 0.0
    %524 = vmatpush1.msra.mxu0 0.0
    %525 = vmatprep.subr.mxu0 0.0
    %526 = vmatpush1.msra.mxu0 0.0
    %527 = vmatprep.subr.mxu0 0.0
    %528 = vmatpush1.msra.mxu0 0.0
    %529 = vmatprep.subr.mxu0 0.0
    %530 = vmatpush1.msra.mxu0 0.0
    %531 = vmatprep.subr.mxu0 0.0
    %532 = vmatpush1.msra.mxu0 0.0
    %533 = vmatprep.subr.mxu0 0.0
    %534 = vmatpush1.msra.mxu0 0.0
    %535 = vmatprep.subr.mxu0 0.0
    %536 = vmatpush1.msra.mxu0 0.0
    %537 = vmatprep.subr.mxu0 0.0
    %538 = vmatpush1.msra.mxu0 0.0
    %539 = vmatprep.subr.mxu0 0.0
    %540 = vmatpush1.msra.mxu0 0.0
    %541 = vmatprep.subr.mxu0 0.0
    %542 = vmatpush1.msra.mxu0 0.0
    %543 = vmatprep.subr.mxu0 0.0
    %544 = vmatpush1.msra.mxu0 0.0
    %545 = vmatprep.subr.mxu0 0.0
    %546 = vmatpush1.msra.mxu0 0.0
    %547 = vmatprep.subr.mxu0 0.0
    %548 = vmatpush1.msra.mxu0 0.0
    %549 = vmatprep.subr.mxu0 0.0
    %550 = vmatpush1.msra.mxu0 0.0
    %551 = vmatprep.subr.mxu0 0.0
    %552 = vmatpush1.msra.mxu0 0.0
    %553 = vmatprep.subr.mxu0 0.0
    %554 = vmatpush1.msra.mxu0 0.0
    %555 = vmatprep.subr.mxu0 0.0
    %556 = vmatpush1.msra.mxu0 0.0
    %557 = vmatprep.subr.mxu0 0.0
    %558 = vmatpush1.msra.mxu0 0.0
    %559 = vmatprep.mubr.f32.mxu0 0.0
    %560 = vmatmul.mubr.f32.gmra.mrb[0].mxu0 %v493
    %v561 = vpop.f32.mrb[0].mxu0
    %v562 = vadd.f32 %v189, %v561
    %v563 = vpop.f32.mrb[0].mxu0
    %564 = vdwg.mxu0
    %v565 = vsel %vm374, %v562, -inf
    %566 = vmax.xlane.f32.xlu0 %v565
    %v567 = vpop.xlane.xlu0 %566
    %v568 = vsub.f32 %v562, %v567
    %v569 = vmul.f32 %v568, 1.442695
    %v570 = vpow.pop %v569
    %v571 = vsel %vm374, %v570, 0.0
    %572 = vadd.xlane.f32.xlu0 %v571
    %v573 = vpop.xlane.xlu0 %572
    %v574 = vlog2.pop %v573
    %v575 = vmul.f32 %v574, 0.6931472
    %v576 = vsub.f32 %v568, %v575
    %577 = vst [vmem:[#allocation10 + $0x1] sm:$0x1] %v576
    %578 = vmatprep.subr.mxu0 0.0
    %579 = vmatpush1.msra.mxu0 %v181
    %580 = vmatprep.subr.mxu0 0.0
    %581 = vmatpush1.msra.mxu0 %v182
    %582 = vmatprep.subr.mxu0 0.0
    %583 = vmatpush1.msra.mxu0 %v183
    %584 = vmatprep.subr.mxu0 0.0
    %585 = vmatpush1.msra.mxu0 %v184
    %586 = vmatprep.subr.mxu0 0.0
    %587 = vmatpush1.msra.mxu0 0.0
    %588 = vmatprep.subr.mxu0 0.0
    %589 = vmatpush1.msra.mxu0 0.0
    %590 = vmatprep.subr.mxu0 0.0
    %591 = vmatpush1.msra.mxu0 0.0
    %592 = vmatprep.subr.mxu0 0.0
    %593 = vmatpush1.msra.mxu0 0.0
    %594 = vmatprep.subr.mxu0 0.0
    %595 = vmatpush1.msra.mxu0 0.0
    %596 = vmatprep.subr.mxu0 0.0
    %597 = vmatpush1.msra.mxu0 0.0
    %598 = vmatprep.subr.mxu0 0.0
    %599 = vmatpush1.msra.mxu0 0.0
    %600 = vmatprep.subr.mxu0 0.0
    %601 = vmatpush1.msra.mxu0 0.0
    %602 = vmatprep.subr.mxu0 0.0
    %603 = vmatpush1.msra.mxu0 0.0
    %604 = vmatprep.subr.mxu0 0.0
    %605 = vmatpush1.msra.mxu0 0.0
    %606 = vmatprep.subr.mxu0 0.0
    %607 = vmatpush1.msra.mxu0 0.0
    %608 = vmatprep.subr.mxu0 0.0
    %609 = vmatpush1.msra.mxu0 0.0
    %610 = vmatprep.subr.mxu0 0.0
    %611 = vmatpush1.msra.mxu0 0.0
    %612 = vmatprep.subr.mxu0 0.0
    %613 = vmatpush1.msra.mxu0 0.0
    %614 = vmatprep.subr.mxu0 0.0
    %615 = vmatpush1.msra.mxu0 0.0
    %616 = vmatprep.subr.mxu0 0.0
    %617 = vmatpush1.msra.mxu0 0.0
    %618 = vmatprep.subr.mxu0 0.0
    %619 = vmatpush1.msra.mxu0 0.0
    %620 = vmatprep.subr.mxu0 0.0
    %621 = vmatpush1.msra.mxu0 0.0
    %622 = vmatprep.subr.mxu0 0.0
    %623 = vmatpush1.msra.mxu0 0.0
    %624 = vmatprep.subr.mxu0 0.0
    %625 = vmatpush1.msra.mxu0 0.0
    %626 = vmatprep.subr.mxu0 0.0
    %627 = vmatpush1.msra.mxu0 0.0
    %628 = vmatprep.subr.mxu0 0.0
    %629 = vmatpush1.msra.mxu0 0.0
    %630 = vmatprep.subr.mxu0 0.0
    %631 = vmatpush1.msra.mxu0 0.0
    %632 = vmatprep.subr.mxu0 0.0
    %633 = vmatpush1.msra.mxu0 0.0
    %634 = vmatprep.subr.mxu0 0.0
    %635 = vmatpush1.msra.mxu0 0.0
    %636 = vmatprep.subr.mxu0 0.0
    %637 = vmatpush1.msra.mxu0 0.0
    %638 = vmatprep.subr.mxu0 0.0
    %639 = vmatpush1.msra.mxu0 0.0
    %640 = vmatprep.subr.mxu0 0.0
    %641 = vmatpush1.msra.mxu0 0.0
    %642 = vmatprep.mubr.f32.mxu0 0.0
    %643 = vmatmul.mubr.f32.gmra.mrb[0].mxu0 %v493
    %v644 = vpop.f32.mrb[0].mxu0
    %v645 = vadd.f32 0.0, %v644
    %v646 = vpop.f32.mrb[0].mxu0
    %647 = vdwg.mxu0
    %v649 = vrot.slane %v645, 6
    %v651 = vadd.f32 %v178, %v649
    %v652 = vxor.u32 %v651, 2147483648
    %v653 = vmul.f32 %v652, 1.442695
    %v654 = vpow.pop %v653
    %v655 = vadd.f32 %v654, 1.0
    %v656 = vrcp.pop %v655
    %v657 = vmul.f32 1.0, %v656
    %v658 = vtanh.pop %v651
    %v660 = vrot.slane %v482, 7
    %v662 = vmul.f32 %v657, %v660
    %664 = vrot.lane.b32.xlu0 %v658, 64
    %v665 = vpop.permute.xlu0 %664
    %v667 = vmul.f32 %v657, %v665
    %669 = vrot.lane.b32.xlu0 %v667, 32
    %v670 = vpop.permute.xlu0 %669
    %v672 = vadd.f32 %v662, %v670
    %v673 = vtanh.pop %v672
    %675 = vrot.lane.b32.xlu0 %v673, 64
    %v676 = vpop.permute.xlu0 %675
    %v678 = vmul.f32 %v657, %v676
    %v680 = vrot.slane %v678, 2
    %681 = vrot.lane.b32.xlu0 %v680, 32
    %v682 = vpop.permute.xlu0 %681
    %v683 = vsel %vm192, %v682, 0
    %685 = vmatprep.subr.mxu0 0.0
    %686 = vmatpush1.msra.mxu0 %v185
    %687 = vmatprep.subr.mxu0 0.0
    %688 = vmatpush1.msra.mxu0 %v186
    %689 = vmatprep.subr.mxu0 0.0
    %690 = vmatpush1.msra.mxu0 %v187
    %691 = vmatprep.subr.mxu0 0.0
    %692 = vmatpush1.msra.mxu0 %v188
    %693 = vmatprep.subr.mxu0 0.0
    %694 = vmatpush1.msra.mxu0 0.0
    %695 = vmatprep.subr.mxu0 0.0
    %696 = vmatpush1.msra.mxu0 0.0
    %697 = vmatprep.subr.mxu0 0.0
    %698 = vmatpush1.msra.mxu0 0.0
    %699 = vmatprep.subr.mxu0 0.0
    %700 = vmatpush1.msra.mxu0 0.0
    %701 = vmatprep.subr.mxu0 0.0
    %702 = vmatpush1.msra.mxu0 0.0
    %703 = vmatprep.subr.mxu0 0.0
    %704 = vmatpush1.msra.mxu0 0.0
    %705 = vmatprep.subr.mxu0 0.0
    %706 = vmatpush1.msra.mxu0 0.0
    %707 = vmatprep.subr.mxu0 0.0
    %708 = vmatpush1.msra.mxu0 0.0
    %709 = vmatprep.subr.mxu0 0.0
    %710 = vmatpush1.msra.mxu0 0.0
    %711 = vmatprep.subr.mxu0 0.0
    %712 = vmatpush1.msra.mxu0 0.0
    %713 = vmatprep.subr.mxu0 0.0
    %714 = vmatpush1.msra.mxu0 0.0
    %715 = vmatprep.subr.mxu0 0.0
    %716 = vmatpush1.msra.mxu0 0.0
    %717 = vmatprep.subr.mxu0 0.0
    %718 = vmatpush1.msra.mxu0 0.0
    %719 = vmatprep.subr.mxu0 0.0
    %720 = vmatpush1.msra.mxu0 0.0
    %721 = vmatprep.subr.mxu0 0.0
    %722 = vmatpush1.msra.mxu0 0.0
    %723 = vmatprep.subr.mxu0 0.0
    %724 = vmatpush1.msra.mxu0 0.0
    %725 = vmatprep.subr.mxu0 0.0
    %726 = vmatpush1.msra.mxu0 0.0
    %727 = vmatprep.subr.mxu0 0.0
    %728 = vmatpush1.msra.mxu0 0.0
    %729 = vmatprep.subr.mxu0 0.0
    %730 = vmatpush1.msra.mxu0 0.0
    %731 = vmatprep.subr.mxu0 0.0
    %732 = vmatpush1.msra.mxu0 0.0
    %733 = vmatprep.subr.mxu0 0.0
    %734 = vmatpush1.msra.mxu0 0.0
    %735 = vmatprep.subr.mxu0 0.0
    %736 = vmatpush1.msra.mxu0 0.0
    %737 = vmatprep.subr.mxu0 0.0
    %738 = vmatpush1.msra.mxu0 0.0
    %739 = vmatprep.subr.mxu0 0.0
    %740 = vmatpush1.msra.mxu0 0.0
    %741 = vmatprep.subr.mxu0 0.0
    %742 = vmatpush1.msra.mxu0 0.0
    %743 = vmatprep.subr.mxu0 0.0
    %744 = vmatpush1.msra.mxu0 0.0
    %745 = vmatprep.subr.mxu0 0.0
    %746 = vmatpush1.msra.mxu0 0.0
    %747 = vmatprep.subr.mxu0 0.0
    %748 = vmatpush1.msra.mxu0 0.0
    %749 = vmatprep.mubr.f32.mxu0 0.0
    %750 = vmatmul.mubr.f32.gmra.mrb[0].mxu0 %v683
    %v751 = vpop.f32.mrb[0].mxu0
    %v752 = vadd.f32 %v189, %v751
    %v753 = vpop.f32.mrb[0].mxu0
    %754 = vdwg.mxu0
    %v755 = vsel %vm374, %v752, -inf
    %756 = vmax.xlane.f32.xlu0 %v755
    %v757 = vpop.xlane.xlu0 %756
    %v758 = vsub.f32 %v752, %v757
    %v759 = vmul.f32 %v758, 1.442695
    %v760 = vpow.pop %v759
    %v761 = vsel %vm374, %v760, 0.0
    %762 = vadd.xlane.f32.xlu0 %v761
    %v763 = vpop.xlane.xlu0 %762
    %v764 = vlog2.pop %v763
    %v765 = vmul.f32 %v764, 0.6931472
    %v766 = vsub.f32 %v758, %v765
    %767 = vst [vmem:[#allocation10 + $0x2] sm:$0x1] %v766
    %768 = vmatprep.subr.mxu0 0.0
    %769 = vmatpush1.msra.mxu0 %v181
    %770 = vmatprep.subr.mxu0 0.0
    %771 = vmatpush1.msra.mxu0 %v182
    %772 = vmatprep.subr.mxu0 0.0
    %773 = vmatpush1.msra.mxu0 %v183
    %774 = vmatprep.subr.mxu0 0.0
    %775 = vmatpush1.msra.mxu0 %v184
    %776 = vmatprep.subr.mxu0 0.0
    %777 = vmatpush1.msra.mxu0 0.0
    %778 = vmatprep.subr.mxu0 0.0
    %779 = vmatpush1.msra.mxu0 0.0
    %780 = vmatprep.subr.mxu0 0.0
    %781 = vmatpush1.msra.mxu0 0.0
    %782 = vmatprep.subr.mxu0 0.0
    %783 = vmatpush1.msra.mxu0 0.0
    %784 = vmatprep.subr.mxu0 0.0
    %785 = vmatpush1.msra.mxu0 0.0
    %786 = vmatprep.subr.mxu0 0.0
    %787 = vmatpush1.msra.mxu0 0.0
    %788 = vmatprep.subr.mxu0 0.0
    %789 = vmatpush1.msra.mxu0 0.0
    %790 = vmatprep.subr.mxu0 0.0
    %791 = vmatpush1.msra.mxu0 0.0
    %792 = vmatprep.subr.mxu0 0.0
    %793 = vmatpush1.msra.mxu0 0.0
    %794 = vmatprep.subr.mxu0 0.0
    %795 = vmatpush1.msra.mxu0 0.0
    %796 = vmatprep.subr.mxu0 0.0
    %797 = vmatpush1.msra.mxu0 0.0
    %798 = vmatprep.subr.mxu0 0.0
    %799 = vmatpush1.msra.mxu0 0.0
    %800 = vmatprep.subr.mxu0 0.0
    %801 = vmatpush1.msra.mxu0 0.0
    %802 = vmatprep.subr.mxu0 0.0
    %803 = vmatpush1.msra.mxu0 0.0
    %804 = vmatprep.subr.mxu0 0.0
    %805 = vmatpush1.msra.mxu0 0.0
    %806 = vmatprep.subr.mxu0 0.0
    %807 = vmatpush1.msra.mxu0 0.0
    %808 = vmatprep.subr.mxu0 0.0
    %809 = vmatpush1.msra.mxu0 0.0
    %810 = vmatprep.subr.mxu0 0.0
    %811 = vmatpush1.msra.mxu0 0.0
    %812 = vmatprep.subr.mxu0 0.0
    %813 = vmatpush1.msra.mxu0 0.0
    %814 = vmatprep.subr.mxu0 0.0
    %815 = vmatpush1.msra.mxu0 0.0
    %816 = vmatprep.subr.mxu0 0.0
    %817 = vmatpush1.msra.mxu0 0.0
    %818 = vmatprep.subr.mxu0 0.0
    %819 = vmatpush1.msra.mxu0 0.0
    %820 = vmatprep.subr.mxu0 0.0
    %821 = vmatpush1.msra.mxu0 0.0
    %822 = vmatprep.subr.mxu0 0.0
    %823 = vmatpush1.msra.mxu0 0.0
    %824 = vmatprep.subr.mxu0 0.0
    %825 = vmatpush1.msra.mxu0 0.0
    %826 = vmatprep.subr.mxu0 0.0
    %827 = vmatpush1.msra.mxu0 0.0
    %828 = vmatprep.subr.mxu0 0.0
    %829 = vmatpush1.msra.mxu0 0.0
    %830 = vmatprep.subr.mxu0 0.0
    %831 = vmatpush1.msra.mxu0 0.0
    %832 = vmatprep.mubr.f32.mxu0 0.0
    %833 = vmatmul.mubr.f32.gmra.mrb[0].mxu0 %v683
    %v834 = vpop.f32.mrb[0].mxu0
    %v835 = vadd.f32 0.0, %v834
    %v836 = vpop.f32.mrb[0].mxu0
    %837 = vdwg.mxu0
    %v839 = vrot.slane %v835, 5
    %v841 = vadd.f32 %v178, %v839
    %v842 = vxor.u32 %v841, 2147483648
    %v843 = vmul.f32 %v842, 1.442695
    %v844 = vpow.pop %v843
    %v845 = vadd.f32 %v844, 1.0
    %v846 = vrcp.pop %v845
    %v847 = vmul.f32 1.0, %v846
    %v848 = vtanh.pop %v841
    %v850 = vrot.slane %v672, 7
    %v852 = vmul.f32 %v847, %v850
    %854 = vrot.lane.b32.xlu0 %v848, 64
    %v855 = vpop.permute.xlu0 %854
    %v857 = vmul.f32 %v847, %v855
    %859 = vrot.lane.b32.xlu0 %v857, 32
    %v860 = vpop.permute.xlu0 %859
    %v862 = vadd.f32 %v852, %v860
    %v863 = vtanh.pop %v862
    %865 = vrot.lane.b32.xlu0 %v863, 64
    %v866 = vpop.permute.xlu0 %865
    %v868 = vmul.f32 %v847, %v866
    %v870 = vrot.slane %v868, 3
    %871 = vrot.lane.b32.xlu0 %v870, 32
    %v872 = vpop.permute.xlu0 %871
    %v873 = vsel %vm192, %v872, 0
    %875 = vmatprep.subr.mxu0 0.0
    %876 = vmatpush1.msra.mxu0 %v185
    %877 = vmatprep.subr.mxu0 0.0
    %878 = vmatpush1.msra.mxu0 %v186
    %879 = vmatprep.subr.mxu0 0.0
    %880 = vmatpush1.msra.mxu0 %v187
    %881 = vmatprep.subr.mxu0 0.0
    %882 = vmatpush1.msra.mxu0 %v188
    %883 = vmatprep.subr.mxu0 0.0
    %884 = vmatpush1.msra.mxu0 0.0
    %885 = vmatprep.subr.mxu0 0.0
    %886 = vmatpush1.msra.mxu0 0.0
    %887 = vmatprep.subr.mxu0 0.0
    %888 = vmatpush1.msra.mxu0 0.0
    %889 = vmatprep.subr.mxu0 0.0
    %890 = vmatpush1.msra.mxu0 0.0
    %891 = vmatprep.subr.mxu0 0.0
    %892 = vmatpush1.msra.mxu0 0.0
    %893 = vmatprep.subr.mxu0 0.0
    %894 = vmatpush1.msra.mxu0 0.0
    %895 = vmatprep.subr.mxu0 0.0
    %896 = vmatpush1.msra.mxu0 0.0
    %897 = vmatprep.subr.mxu0 0.0
    %898 = vmatpush1.msra.mxu0 0.0
    %899 = vmatprep.subr.mxu0 0.0
    %900 = vmatpush1.msra.mxu0 0.0
    %901 = vmatprep.subr.mxu0 0.0
    %902 = vmatpush1.msra.mxu0 0.0
    %903 = vmatprep.subr.mxu0 0.0
    %904 = vmatpush1.msra.mxu0 0.0
    %905 = vmatprep.subr.mxu0 0.0
    %906 = vmatpush1.msra.mxu0 0.0
    %907 = vmatprep.subr.mxu0 0.0
    %908 = vmatpush1.msra.mxu0 0.0
    %909 = vmatprep.subr.mxu0 0.0
    %910 = vmatpush1.msra.mxu0 0.0
    %911 = vmatprep.subr.mxu0 0.0
    %912 = vmatpush1.msra.mxu0 0.0
    %913 = vmatprep.subr.mxu0 0.0
    %914 = vmatpush1.msra.mxu0 0.0
    %915 = vmatprep.subr.mxu0 0.0
    %916 = vmatpush1.msra.mxu0 0.0
    %917 = vmatprep.subr.mxu0 0.0
    %918 = vmatpush1.msra.mxu0 0.0
    %919 = vmatprep.subr.mxu0 0.0
    %920 = vmatpush1.msra.mxu0 0.0
    %921 = vmatprep.subr.mxu0 0.0
    %922 = vmatpush1.msra.mxu0 0.0
    %923 = vmatprep.subr.mxu0 0.0
    %924 = vmatpush1.msra.mxu0 0.0
    %925 = vmatprep.subr.mxu0 0.0
    %926 = vmatpush1.msra.mxu0 0.0
    %927 = vmatprep.subr.mxu0 0.0
    %928 = vmatpush1.msra.mxu0 0.0
    %929 = vmatprep.subr.mxu0 0.0
    %930 = vmatpush1.msra.mxu0 0.0
    %931 = vmatprep.subr.mxu0 0.0
    %932 = vmatpush1.msra.mxu0 0.0
    %933 = vmatprep.subr.mxu0 0.0
    %934 = vmatpush1.msra.mxu0 0.0
    %935 = vmatprep.subr.mxu0 0.0
    %936 = vmatpush1.msra.mxu0 0.0
    %937 = vmatprep.subr.mxu0 0.0
    %938 = vmatpush1.msra.mxu0 0.0
    %939 = vmatprep.mubr.f32.mxu0 0.0
    %940 = vmatmul.mubr.f32.gmra.mrb[0].mxu0 %v873
    %v941 = vpop.f32.mrb[0].mxu0
    %v942 = vadd.f32 %v189, %v941
    %v943 = vpop.f32.mrb[0].mxu0
    %944 = vdwg.mxu0
    %v945 = vsel %vm374, %v942, -inf
    %946 = vmax.xlane.f32.xlu0 %v945
    %v947 = vpop.xlane.xlu0 %946
    %v948 = vsub.f32 %v942, %v947
    %v949 = vmul.f32 %v948, 1.442695
    %v950 = vpow.pop %v949
    %v951 = vsel %vm374, %v950, 0.0
    %952 = vadd.xlane.f32.xlu0 %v951
    %v953 = vpop.xlane.xlu0 %952
    %v954 = vlog2.pop %v953
    %v955 = vmul.f32 %v954, 0.6931472
    %v956 = vsub.f32 %v948, %v955
    %957 = vst [vmem:[#allocation10 + $0x3] sm:$0x1] %v956
    %958 = vmatprep.subr.mxu0 0.0
    %959 = vmatpush1.msra.mxu0 %v181
    %960 = vmatprep.subr.mxu0 0.0
    %961 = vmatpush1.msra.mxu0 %v182
    %962 = vmatprep.subr.mxu0 0.0
    %963 = vmatpush1.msra.mxu0 %v183
    %964 = vmatprep.subr.mxu0 0.0
    %965 = vmatpush1.msra.mxu0 %v184
    %966 = vmatprep.subr.mxu0 0.0
    %967 = vmatpush1.msra.mxu0 0.0
    %968 = vmatprep.subr.mxu0 0.0
    %969 = vmatpush1.msra.mxu0 0.0
    %970 = vmatprep.subr.mxu0 0.0
    %971 = vmatpush1.msra.mxu0 0.0
    %972 = vmatprep.subr.mxu0 0.0
    %973 = vmatpush1.msra.mxu0 0.0
    %974 = vmatprep.subr.mxu0 0.0
    %975 = vmatpush1.msra.mxu0 0.0
    %976 = vmatprep.subr.mxu0 0.0
    %977 = vmatpush1.msra.mxu0 0.0
    %978 = vmatprep.subr.mxu0 0.0
    %979 = vmatpush1.msra.mxu0 0.0
    %980 = vmatprep.subr.mxu0 0.0
    %981 = vmatpush1.msra.mxu0 0.0
    %982 = vmatprep.subr.mxu0 0.0
    %983 = vmatpush1.msra.mxu0 0.0
    %984 = vmatprep.subr.mxu0 0.0
    %985 = vmatpush1.msra.mxu0 0.0
    %986 = vmatprep.subr.mxu0 0.0
    %987 = vmatpush1.msra.mxu0 0.0
    %988 = vmatprep.subr.mxu0 0.0
    %989 = vmatpush1.msra.mxu0 0.0
    %990 = vmatprep.subr.mxu0 0.0
    %991 = vmatpush1.msra.mxu0 0.0
    %992 = vmatprep.subr.mxu0 0.0
    %993 = vmatpush1.msra.mxu0 0.0
    %994 = vmatprep.subr.mxu0 0.0
    %995 = vmatpush1.msra.mxu0 0.0
    %996 = vmatprep.subr.mxu0 0.0
    %997 = vmatpush1.msra.mxu0 0.0
    %998 = vmatprep.subr.mxu0 0.0
    %999 = vmatpush1.msra.mxu0 0.0
    %1000 = vmatprep.subr.mxu0 0.0
    %1001 = vmatpush1.msra.mxu0 0.0
    %1002 = vmatprep.subr.mxu0 0.0
    %1003 = vmatpush1.msra.mxu0 0.0
    %1004 = vmatprep.subr.mxu0 0.0
    %1005 = vmatpush1.msra.mxu0 0.0
    %1006 = vmatprep.subr.mxu0 0.0
    %1007 = vmatpush1.msra.mxu0 0.0
    %1008 = vmatprep.subr.mxu0 0.0
    %1009 = vmatpush1.msra.mxu0 0.0
    %1010 = vmatprep.subr.mxu0 0.0
    %1011 = vmatpush1.msra.mxu0 0.0
    %1012 = vmatprep.subr.mxu0 0.0
    %1013 = vmatpush1.msra.mxu0 0.0
    %1014 = vmatprep.subr.mxu0 0.0
    %1015 = vmatpush1.msra.mxu0 0.0
    %1016 = vmatprep.subr.mxu0 0.0
    %1017 = vmatpush1.msra.mxu0 0.0
    %1018 = vmatprep.subr.mxu0 0.0
    %1019 = vmatpush1.msra.mxu0 0.0
    %1020 = vmatprep.subr.mxu0 0.0
    %1021 = vmatpush1.msra.mxu0 0.0
    %1022 = vmatprep.mubr.f32.mxu0 0.0
    %1023 = vmatmul.mubr.f32.gmra.mrb[0].mxu0 %v873
    %v1024 = vpop.f32.mrb[0].mxu0
    %v1025 = vadd.f32 0.0, %v1024
    %v1026 = vpop.f32.mrb[0].mxu0
    %1027 = vdwg.mxu0
    %v1029 = vrot.slane %v1025, 4
    %v1031 = vadd.f32 %v178, %v1029
    %v1032 = vxor.u32 %v1031, 2147483648
    %v1033 = vmul.f32 %v1032, 1.442695
    %v1034 = vpow.pop %v1033
    %v1035 = vadd.f32 %v1034, 1.0
    %v1036 = vrcp.pop %v1035
    %v1037 = vmul.f32 1.0, %v1036
    %v1038 = vtanh.pop %v1031
    %v1040 = vrot.slane %v862, 7
    %v1042 = vmul.f32 %v1037, %v1040
    %1044 = vrot.lane.b32.xlu0 %v1038, 64
    %v1045 = vpop.permute.xlu0 %1044
    %v1047 = vmul.f32 %v1037, %v1045
    %1049 = vrot.lane.b32.xlu0 %v1047, 32
    %v1050 = vpop.permute.xlu0 %1049
    %v1052 = vadd.f32 %v1042, %v1050
    %v1053 = vtanh.pop %v1052
    %1055 = vrot.lane.b32.xlu0 %v1053, 64
    %v1056 = vpop.permute.xlu0 %1055
    %v1058 = vmul.f32 %v1037, %v1056
    %v1060 = vrot.slane %v1058, 4
    %1061 = vrot.lane.b32.xlu0 %v1060, 32
    %v1062 = vpop.permute.xlu0 %1061
    %v1063 = vsel %vm192, %v1062, 0
    %1065 = vmatprep.subr.mxu0 0.0
    %1066 = vmatpush1.msra.mxu0 %v185
    %1067 = vmatprep.subr.mxu0 0.0
    %1068 = vmatpush1.msra.mxu0 %v186
    %1069 = vmatprep.subr.mxu0 0.0
    %1070 = vmatpush1.msra.mxu0 %v187
    %1071 = vmatprep.subr.mxu0 0.0
    %1072 = vmatpush1.msra.mxu0 %v188
    %1073 = vmatprep.subr.mxu0 0.0
    %1074 = vmatpush1.msra.mxu0 0.0
    %1075 = vmatprep.subr.mxu0 0.0
    %1076 = vmatpush1.msra.mxu0 0.0
    %1077 = vmatprep.subr.mxu0 0.0
    %1078 = vmatpush1.msra.mxu0 0.0
    %1079 = vmatprep.subr.mxu0 0.0
    %1080 = vmatpush1.msra.mxu0 0.0
    %1081 = vmatprep.subr.mxu0 0.0
    %1082 = vmatpush1.msra.mxu0 0.0
    %1083 = vmatprep.subr.mxu0 0.0
    %1084 = vmatpush1.msra.mxu0 0.0
    %1085 = vmatprep.subr.mxu0 0.0
    %1086 = vmatpush1.msra.mxu0 0.0
    %1087 = vmatprep.subr.mxu0 0.0
    %1088 = vmatpush1.msra.mxu0 0.0
    %1089 = vmatprep.subr.mxu0 0.0
    %1090 = vmatpush1.msra.mxu0 0.0
    %1091 = vmatprep.subr.mxu0 0.0
    %1092 = vmatpush1.msra.mxu0 0.0
    %1093 = vmatprep.subr.mxu0 0.0
    %1094 = vmatpush1.msra.mxu0 0.0
    %1095 = vmatprep.subr.mxu0 0.0
    %1096 = vmatpush1.msra.mxu0 0.0
    %1097 = vmatprep.subr.mxu0 0.0
    %1098 = vmatpush1.msra.mxu0 0.0
    %1099 = vmatprep.subr.mxu0 0.0
    %1100 = vmatpush1.msra.mxu0 0.0
    %1101 = vmatprep.subr.mxu0 0.0
    %1102 = vmatpush1.msra.mxu0 0.0
    %1103 = vmatprep.subr.mxu0 0.0
    %1104 = vmatpush1.msra.mxu0 0.0
    %1105 = vmatprep.subr.mxu0 0.0
    %1106 = vmatpush1.msra.mxu0 0.0
    %1107 = vmatprep.subr.mxu0 0.0
    %1108 = vmatpush1.msra.mxu0 0.0
    %1109 = vmatprep.subr.mxu0 0.0
    %1110 = vmatpush1.msra.mxu0 0.0
    %1111 = vmatprep.subr.mxu0 0.0
    %1112 = vmatpush1.msra.mxu0 0.0
    %1113 = vmatprep.subr.mxu0 0.0
    %1114 = vmatpush1.msra.mxu0 0.0
    %1115 = vmatprep.subr.mxu0 0.0
    %1116 = vmatpush1.msra.mxu0 0.0
    %1117 = vmatprep.subr.mxu0 0.0
    %1118 = vmatpush1.msra.mxu0 0.0
    %1119 = vmatprep.subr.mxu0 0.0
    %1120 = vmatpush1.msra.mxu0 0.0
    %1121 = vmatprep.subr.mxu0 0.0
    %1122 = vmatpush1.msra.mxu0 0.0
    %1123 = vmatprep.subr.mxu0 0.0
    %1124 = vmatpush1.msra.mxu0 0.0
    %1125 = vmatprep.subr.mxu0 0.0
    %1126 = vmatpush1.msra.mxu0 0.0
    %1127 = vmatprep.subr.mxu0 0.0
    %1128 = vmatpush1.msra.mxu0 0.0
    %1129 = vmatprep.mubr.f32.mxu0 0.0
    %1130 = vmatmul.mubr.f32.gmra.mrb[0].mxu0 %v1063
    %v1131 = vpop.f32.mrb[0].mxu0
    %v1132 = vadd.f32 %v189, %v1131
    %v1133 = vpop.f32.mrb[0].mxu0
    %1134 = vdwg.mxu0
    %v1135 = vsel %vm374, %v1132, -inf
    %1136 = vmax.xlane.f32.xlu0 %v1135
    %v1137 = vpop.xlane.xlu0 %1136
    %v1138 = vsub.f32 %v1132, %v1137
    %v1139 = vmul.f32 %v1138, 1.442695
    %v1140 = vpow.pop %v1139
    %v1141 = vsel %vm374, %v1140, 0.0
    %1142 = vadd.xlane.f32.xlu0 %v1141
    %v1143 = vpop.xlane.xlu0 %1142
    %v1144 = vlog2.pop %v1143
    %v1145 = vmul.f32 %v1144, 0.6931472
    %v1146 = vsub.f32 %v1138, %v1145
    %1147 = vst [vmem:[#allocation10 + $0x4] sm:$0x1] %v1146
    %1148 = vmatprep.subr.mxu0 0.0
    %1149 = vmatpush1.msra.mxu0 %v181
    %1150 = vmatprep.subr.mxu0 0.0
    %1151 = vmatpush1.msra.mxu0 %v182
    %1152 = vmatprep.subr.mxu0 0.0
    %1153 = vmatpush1.msra.mxu0 %v183
    %1154 = vmatprep.subr.mxu0 0.0
    %1155 = vmatpush1.msra.mxu0 %v184
    %1156 = vmatprep.subr.mxu0 0.0
    %1157 = vmatpush1.msra.mxu0 0.0
    %1158 = vmatprep.subr.mxu0 0.0
    %1159 = vmatpush1.msra.mxu0 0.0
    %1160 = vmatprep.subr.mxu0 0.0
    %1161 = vmatpush1.msra.mxu0 0.0
    %1162 = vmatprep.subr.mxu0 0.0
    %1163 = vmatpush1.msra.mxu0 0.0
    %1164 = vmatprep.subr.mxu0 0.0
    %1165 = vmatpush1.msra.mxu0 0.0
    %1166 = vmatprep.subr.mxu0 0.0
    %1167 = vmatpush1.msra.mxu0 0.0
    %1168 = vmatprep.subr.mxu0 0.0
    %1169 = vmatpush1.msra.mxu0 0.0
    %1170 = vmatprep.subr.mxu0 0.0
    %1171 = vmatpush1.msra.mxu0 0.0
    %1172 = vmatprep.subr.mxu0 0.0
    %1173 = vmatpush1.msra.mxu0 0.0
    %1174 = vmatprep.subr.mxu0 0.0
    %1175 = vmatpush1.msra.mxu0 0.0
    %1176 = vmatprep.subr.mxu0 0.0
    %1177 = vmatpush1.msra.mxu0 0.0
    %1178 = vmatprep.subr.mxu0 0.0
    %1179 = vmatpush1.msra.mxu0 0.0
    %1180 = vmatprep.subr.mxu0 0.0
    %1181 = vmatpush1.msra.mxu0 0.0
    %1182 = vmatprep.subr.mxu0 0.0
    %1183 = vmatpush1.msra.mxu0 0.0
    %1184 = vmatprep.subr.mxu0 0.0
    %1185 = vmatpush1.msra.mxu0 0.0
    %1186 = vmatprep.subr.mxu0 0.0
    %1187 = vmatpush1.msra.mxu0 0.0
    %1188 = vmatprep.subr.mxu0 0.0
    %1189 = vmatpush1.msra.mxu0 0.0
    %1190 = vmatprep.subr.mxu0 0.0
    %1191 = vmatpush1.msra.mxu0 0.0
    %1192 = vmatprep.subr.mxu0 0.0
    %1193 = vmatpush1.msra.mxu0 0.0
    %1194 = vmatprep.subr.mxu0 0.0
    %1195 = vmatpush1.msra.mxu0 0.0
    %1196 = vmatprep.subr.mxu0 0.0
    %1197 = vmatpush1.msra.mxu0 0.0
    %1198 = vmatprep.subr.mxu0 0.0
    %1199 = vmatpush1.msra.mxu0 0.0
    %1200 = vmatprep.subr.mxu0 0.0
    %1201 = vmatpush1.msra.mxu0 0.0
    %1202 = vmatprep.subr.mxu0 0.0
    %1203 = vmatpush1.msra.mxu0 0.0
    %1204 = vmatprep.subr.mxu0 0.0
    %1205 = vmatpush1.msra.mxu0 0.0
    %1206 = vmatprep.subr.mxu0 0.0
    %1207 = vmatpush1.msra.mxu0 0.0
    %1208 = vmatprep.subr.mxu0 0.0
    %1209 = vmatpush1.msra.mxu0 0.0
    %1210 = vmatprep.subr.mxu0 0.0
    %1211 = vmatpush1.msra.mxu0 0.0
    %1212 = vmatprep.mubr.f32.mxu0 0.0
    %1213 = vmatmul.mubr.f32.gmra.mrb[0].mxu0 %v1063
    %v1214 = vpop.f32.mrb[0].mxu0
    %v1215 = vadd.f32 0.0, %v1214
    %v1216 = vpop.f32.mrb[0].mxu0
    %1217 = vdwg.mxu0
    %v1219 = vrot.slane %v1215, 3
    %v1221 = vadd.f32 %v178, %v1219
    %v1222 = vxor.u32 %v1221, 2147483648
    %v1223 = vmul.f32 %v1222, 1.442695
    %v1224 = vpow.pop %v1223
    %v1225 = vadd.f32 %v1224, 1.0
    %v1226 = vrcp.pop %v1225
    %v1227 = vmul.f32 1.0, %v1226
    %v1228 = vtanh.pop %v1221
    %v1230 = vrot.slane %v1052, 7
    %v1232 = vmul.f32 %v1227, %v1230
    %1234 = vrot.lane.b32.xlu0 %v1228, 64
    %v1235 = vpop.permute.xlu0 %1234
    %v1237 = vmul.f32 %v1227, %v1235
    %1239 = vrot.lane.b32.xlu0 %v1237, 32
    %v1240 = vpop.permute.xlu0 %1239
    %v1242 = vadd.f32 %v1232, %v1240
    %v1243 = vtanh.pop %v1242
    %1245 = vrot.lane.b32.xlu0 %v1243, 64
    %v1246 = vpop.permute.xlu0 %1245
    %v1248 = vmul.f32 %v1227, %v1246
    %v1250 = vrot.slane %v1248, 5
    %1251 = vrot.lane.b32.xlu0 %v1250, 32
    %v1252 = vpop.permute.xlu0 %1251
    %v1253 = vsel %vm192, %v1252, 0
    %1255 = vmatprep.subr.mxu0 0.0
    %1256 = vmatpush1.msra.mxu0 %v185
    %1257 = vmatprep.subr.mxu0 0.0
    %1258 = vmatpush1.msra.mxu0 %v186
    %1259 = vmatprep.subr.mxu0 0.0
    %1260 = vmatpush1.msra.mxu0 %v187
    %1261 = vmatprep.subr.mxu0 0.0
    %1262 = vmatpush1.msra.mxu0 %v188
    %1263 = vmatprep.subr.mxu0 0.0
    %1264 = vmatpush1.msra.mxu0 0.0
    %1265 = vmatprep.subr.mxu0 0.0
    %1266 = vmatpush1.msra.mxu0 0.0
    %1267 = vmatprep.subr.mxu0 0.0
    %1268 = vmatpush1.msra.mxu0 0.0
    %1269 = vmatprep.subr.mxu0 0.0
    %1270 = vmatpush1.msra.mxu0 0.0
    %1271 = vmatprep.subr.mxu0 0.0
    %1272 = vmatpush1.msra.mxu0 0.0
    %1273 = vmatprep.subr.mxu0 0.0
    %1274 = vmatpush1.msra.mxu0 0.0
    %1275 = vmatprep.subr.mxu0 0.0
    %1276 = vmatpush1.msra.mxu0 0.0
    %1277 = vmatprep.subr.mxu0 0.0
    %1278 = vmatpush1.msra.mxu0 0.0
    %1279 = vmatprep.subr.mxu0 0.0
    %1280 = vmatpush1.msra.mxu0 0.0
    %1281 = vmatprep.subr.mxu0 0.0
    %1282 = vmatpush1.msra.mxu0 0.0
    %1283 = vmatprep.subr.mxu0 0.0
    %1284 = vmatpush1.msra.mxu0 0.0
    %1285 = vmatprep.subr.mxu0 0.0
    %1286 = vmatpush1.msra.mxu0 0.0
    %1287 = vmatprep.subr.mxu0 0.0
    %1288 = vmatpush1.msra.mxu0 0.0
    %1289 = vmatprep.subr.mxu0 0.0
    %1290 = vmatpush1.msra.mxu0 0.0
    %1291 = vmatprep.subr.mxu0 0.0
    %1292 = vmatpush1.msra.mxu0 0.0
    %1293 = vmatprep.subr.mxu0 0.0
    %1294 = vmatpush1.msra.mxu0 0.0
    %1295 = vmatprep.subr.mxu0 0.0
    %1296 = vmatpush1.msra.mxu0 0.0
    %1297 = vmatprep.subr.mxu0 0.0
    %1298 = vmatpush1.msra.mxu0 0.0
    %1299 = vmatprep.subr.mxu0 0.0
    %1300 = vmatpush1.msra.mxu0 0.0
    %1301 = vmatprep.subr.mxu0 0.0
    %1302 = vmatpush1.msra.mxu0 0.0
    %1303 = vmatprep.subr.mxu0 0.0
    %1304 = vmatpush1.msra.mxu0 0.0
    %1305 = vmatprep.subr.mxu0 0.0
    %1306 = vmatpush1.msra.mxu0 0.0
    %1307 = vmatprep.subr.mxu0 0.0
    %1308 = vmatpush1.msra.mxu0 0.0
    %1309 = vmatprep.subr.mxu0 0.0
    %1310 = vmatpush1.msra.mxu0 0.0
    %1311 = vmatprep.subr.mxu0 0.0
    %1312 = vmatpush1.msra.mxu0 0.0
    %1313 = vmatprep.subr.mxu0 0.0
    %1314 = vmatpush1.msra.mxu0 0.0
    %1315 = vmatprep.subr.mxu0 0.0
    %1316 = vmatpush1.msra.mxu0 0.0
    %1317 = vmatprep.subr.mxu0 0.0
    %1318 = vmatpush1.msra.mxu0 0.0
    %1319 = vmatprep.mubr.f32.mxu0 0.0
    %1320 = vmatmul.mubr.f32.gmra.mrb[0].mxu0 %v1253
    %v1321 = vpop.f32.mrb[0].mxu0
    %v1322 = vadd.f32 %v189, %v1321
    %v1323 = vpop.f32.mrb[0].mxu0
    %1324 = vdwg.mxu0
    %v1325 = vsel %vm374, %v1322, -inf
    %1326 = vmax.xlane.f32.xlu0 %v1325
    %v1327 = vpop.xlane.xlu0 %1326
    %v1328 = vsub.f32 %v1322, %v1327
    %v1329 = vmul.f32 %v1328, 1.442695
    %v1330 = vpow.pop %v1329
    %v1331 = vsel %vm374, %v1330, 0.0
    %1332 = vadd.xlane.f32.xlu0 %v1331
    %v1333 = vpop.xlane.xlu0 %1332
    %v1334 = vlog2.pop %v1333
    %v1335 = vmul.f32 %v1334, 0.6931472
    %v1336 = vsub.f32 %v1328, %v1335
    %1337 = vst [vmem:[#allocation10 + $0x5] sm:$0x1] %v1336
    %1338 = vmatprep.subr.mxu0 0.0
    %1339 = vmatpush1.msra.mxu0 %v181
    %1340 = vmatprep.subr.mxu0 0.0
    %1341 = vmatpush1.msra.mxu0 %v182
    %1342 = vmatprep.subr.mxu0 0.0
    %1343 = vmatpush1.msra.mxu0 %v183
    %1344 = vmatprep.subr.mxu0 0.0
    %1345 = vmatpush1.msra.mxu0 %v184
    %1346 = vmatprep.subr.mxu0 0.0
    %1347 = vmatpush1.msra.mxu0 0.0
    %1348 = vmatprep.subr.mxu0 0.0
    %1349 = vmatpush1.msra.mxu0 0.0
    %1350 = vmatprep.subr.mxu0 0.0
    %1351 = vmatpush1.msra.mxu0 0.0
    %1352 = vmatprep.subr.mxu0 0.0
    %1353 = vmatpush1.msra.mxu0 0.0
    %1354 = vmatprep.subr.mxu0 0.0
    %1355 = vmatpush1.msra.mxu0 0.0
    %1356 = vmatprep.subr.mxu0 0.0
    %1357 = vmatpush1.msra.mxu0 0.0
    %1358 = vmatprep.subr.mxu0 0.0
    %1359 = vmatpush1.msra.mxu0 0.0
    %1360 = vmatprep.subr.mxu0 0.0
    %1361 = vmatpush1.msra.mxu0 0.0
    %1362 = vmatprep.subr.mxu0 0.0
    %1363 = vmatpush1.msra.mxu0 0.0
    %1364 = vmatprep.subr.mxu0 0.0
    %1365 = vmatpush1.msra.mxu0 0.0
    %1366 = vmatprep.subr.mxu0 0.0
    %1367 = vmatpush1.msra.mxu0 0.0
    %1368 = vmatprep.subr.mxu0 0.0
    %1369 = vmatpush1.msra.mxu0 0.0
    %1370 = vmatprep.subr.mxu0 0.0
    %1371 = vmatpush1.msra.mxu0 0.0
    %1372 = vmatprep.subr.mxu0 0.0
    %1373 = vmatpush1.msra.mxu0 0.0
    %1374 = vmatprep.subr.mxu0 0.0
    %1375 = vmatpush1.msra.mxu0 0.0
    %1376 = vmatprep.subr.mxu0 0.0
    %1377 = vmatpush1.msra.mxu0 0.0
    %1378 = vmatprep.subr.mxu0 0.0
    %1379 = vmatpush1.msra.mxu0 0.0
    %1380 = vmatprep.subr.mxu0 0.0
    %1381 = vmatpush1.msra.mxu0 0.0
    %1382 = vmatprep.subr.mxu0 0.0
    %1383 = vmatpush1.msra.mxu0 0.0
    %1384 = vmatprep.subr.mxu0 0.0
    %1385 = vmatpush1.msra.mxu0 0.0
    %1386 = vmatprep.subr.mxu0 0.0
    %1387 = vmatpush1.msra.mxu0 0.0
    %1388 = vmatprep.subr.mxu0 0.0
    %1389 = vmatpush1.msra.mxu0 0.0
    %1390 = vmatprep.subr.mxu0 0.0
    %1391 = vmatpush1.msra.mxu0 0.0
    %1392 = vmatprep.subr.mxu0 0.0
    %1393 = vmatpush1.msra.mxu0 0.0
    %1394 = vmatprep.subr.mxu0 0.0
    %1395 = vmatpush1.msra.mxu0 0.0
    %1396 = vmatprep.subr.mxu0 0.0
    %1397 = vmatpush1.msra.mxu0 0.0
    %1398 = vmatprep.subr.mxu0 0.0
    %1399 = vmatpush1.msra.mxu0 0.0
    %1400 = vmatprep.subr.mxu0 0.0
    %1401 = vmatpush1.msra.mxu0 0.0
    %1402 = vmatprep.mubr.f32.mxu0 0.0
    %1403 = vmatmul.mubr.f32.gmra.mrb[0].mxu0 %v1253
    %v1404 = vpop.f32.mrb[0].mxu0
    %v1405 = vadd.f32 0.0, %v1404
    %v1406 = vpop.f32.mrb[0].mxu0
    %1407 = vdwg.mxu0
    %v1409 = vrot.slane %v1405, 2
    %v1411 = vadd.f32 %v178, %v1409
    %v1412 = vxor.u32 %v1411, 2147483648
    %v1413 = vmul.f32 %v1412, 1.442695
    %v1414 = vpow.pop %v1413
    %v1415 = vadd.f32 %v1414, 1.0
    %v1416 = vrcp.pop %v1415
    %v1417 = vmul.f32 1.0, %v1416
    %v1418 = vtanh.pop %v1411
    %v1420 = vrot.slane %v1242, 7
    %v1422 = vmul.f32 %v1417, %v1420
    %1424 = vrot.lane.b32.xlu0 %v1418, 64
    %v1425 = vpop.permute.xlu0 %1424
    %v1427 = vmul.f32 %v1417, %v1425
    %1429 = vrot.lane.b32.xlu0 %v1427, 32
    %v1430 = vpop.permute.xlu0 %1429
    %v1432 = vadd.f32 %v1422, %v1430
    %v1433 = vtanh.pop %v1432
    %1435 = vrot.lane.b32.xlu0 %v1433, 64
    %v1436 = vpop.permute.xlu0 %1435
    %v1438 = vmul.f32 %v1417, %v1436
    %v1440 = vrot.slane %v1438, 6
    %1441 = vrot.lane.b32.xlu0 %v1440, 32
    %v1442 = vpop.permute.xlu0 %1441
    %v1443 = vsel %vm192, %v1442, 0
    %1445 = vmatprep.subr.mxu0 0.0
    %1446 = vmatpush1.msra.mxu0 %v185
    %1447 = vmatprep.subr.mxu0 0.0
    %1448 = vmatpush1.msra.mxu0 %v186
    %1449 = vmatprep.subr.mxu0 0.0
    %1450 = vmatpush1.msra.mxu0 %v187
    %1451 = vmatprep.subr.mxu0 0.0
    %1452 = vmatpush1.msra.mxu0 %v188
    %1453 = vmatprep.subr.mxu0 0.0
    %1454 = vmatpush1.msra.mxu0 0.0
    %1455 = vmatprep.subr.mxu0 0.0
    %1456 = vmatpush1.msra.mxu0 0.0
    %1457 = vmatprep.subr.mxu0 0.0
    %1458 = vmatpush1.msra.mxu0 0.0
    %1459 = vmatprep.subr.mxu0 0.0
    %1460 = vmatpush1.msra.mxu0 0.0
    %1461 = vmatprep.subr.mxu0 0.0
    %1462 = vmatpush1.msra.mxu0 0.0
    %1463 = vmatprep.subr.mxu0 0.0
    %1464 = vmatpush1.msra.mxu0 0.0
    %1465 = vmatprep.subr.mxu0 0.0
    %1466 = vmatpush1.msra.mxu0 0.0
    %1467 = vmatprep.subr.mxu0 0.0
    %1468 = vmatpush1.msra.mxu0 0.0
    %1469 = vmatprep.subr.mxu0 0.0
    %1470 = vmatpush1.msra.mxu0 0.0
    %1471 = vmatprep.subr.mxu0 0.0
    %1472 = vmatpush1.msra.mxu0 0.0
    %1473 = vmatprep.subr.mxu0 0.0
    %1474 = vmatpush1.msra.mxu0 0.0
    %1475 = vmatprep.subr.mxu0 0.0
    %1476 = vmatpush1.msra.mxu0 0.0
    %1477 = vmatprep.subr.mxu0 0.0
    %1478 = vmatpush1.msra.mxu0 0.0
    %1479 = vmatprep.subr.mxu0 0.0
    %1480 = vmatpush1.msra.mxu0 0.0
    %1481 = vmatprep.subr.mxu0 0.0
    %1482 = vmatpush1.msra.mxu0 0.0
    %1483 = vmatprep.subr.mxu0 0.0
    %1484 = vmatpush1.msra.mxu0 0.0
    %1485 = vmatprep.subr.mxu0 0.0
    %1486 = vmatpush1.msra.mxu0 0.0
    %1487 = vmatprep.subr.mxu0 0.0
    %1488 = vmatpush1.msra.mxu0 0.0
    %1489 = vmatprep.subr.mxu0 0.0
    %1490 = vmatpush1.msra.mxu0 0.0
    %1491 = vmatprep.subr.mxu0 0.0
    %1492 = vmatpush1.msra.mxu0 0.0
    %1493 = vmatprep.subr.mxu0 0.0
    %1494 = vmatpush1.msra.mxu0 0.0
    %1495 = vmatprep.subr.mxu0 0.0
    %1496 = vmatpush1.msra.mxu0 0.0
    %1497 = vmatprep.subr.mxu0 0.0
    %1498 = vmatpush1.msra.mxu0 0.0
    %1499 = vmatprep.subr.mxu0 0.0
    %1500 = vmatpush1.msra.mxu0 0.0
    %1501 = vmatprep.subr.mxu0 0.0
    %1502 = vmatpush1.msra.mxu0 0.0
    %1503 = vmatprep.subr.mxu0 0.0
    %1504 = vmatpush1.msra.mxu0 0.0
    %1505 = vmatprep.subr.mxu0 0.0
    %1506 = vmatpush1.msra.mxu0 0.0
    %1507 = vmatprep.subr.mxu0 0.0
    %1508 = vmatpush1.msra.mxu0 0.0
    %1509 = vmatprep.mubr.f32.mxu0 0.0
    %1510 = vmatmul.mubr.f32.gmra.mrb[0].mxu0 %v1443
    %v1511 = vpop.f32.mrb[0].mxu0
    %v1512 = vadd.f32 %v189, %v1511
    %v1513 = vpop.f32.mrb[0].mxu0
    %1514 = vdwg.mxu0
    %v1515 = vsel %vm374, %v1512, -inf
    %1516 = vmax.xlane.f32.xlu0 %v1515
    %v1517 = vpop.xlane.xlu0 %1516
    %v1518 = vsub.f32 %v1512, %v1517
    %v1519 = vmul.f32 %v1518, 1.442695
    %v1520 = vpow.pop %v1519
    %v1521 = vsel %vm374, %v1520, 0.0
    %1522 = vadd.xlane.f32.xlu0 %v1521
    %v1523 = vpop.xlane.xlu0 %1522
    %v1524 = vlog2.pop %v1523
    %v1525 = vmul.f32 %v1524, 0.6931472
    %v1526 = vsub.f32 %v1518, %v1525
    %1527 = vst [vmem:[#allocation10 + $0x6] sm:$0x1] %v1526
    %1528 = vmatprep.subr.mxu0 0.0
    %1529 = vmatpush1.msra.mxu0 %v181
    %1530 = vmatprep.subr.mxu0 0.0
    %1531 = vmatpush1.msra.mxu0 %v182
    %1532 = vmatprep.subr.mxu0 0.0
    %1533 = vmatpush1.msra.mxu0 %v183
    %1534 = vmatprep.subr.mxu0 0.0
    %1535 = vmatpush1.msra.mxu0 %v184
    %1536 = vmatprep.subr.mxu0 0.0
    %1537 = vmatpush1.msra.mxu0 0.0
    %1538 = vmatprep.subr.mxu0 0.0
    %1539 = vmatpush1.msra.mxu0 0.0
    %1540 = vmatprep.subr.mxu0 0.0
    %1541 = vmatpush1.msra.mxu0 0.0
    %1542 = vmatprep.subr.mxu0 0.0
    %1543 = vmatpush1.msra.mxu0 0.0
    %1544 = vmatprep.subr.mxu0 0.0
    %1545 = vmatpush1.msra.mxu0 0.0
    %1546 = vmatprep.subr.mxu0 0.0
    %1547 = vmatpush1.msra.mxu0 0.0
    %1548 = vmatprep.subr.mxu0 0.0
    %1549 = vmatpush1.msra.mxu0 0.0
    %1550 = vmatprep.subr.mxu0 0.0
    %1551 = vmatpush1.msra.mxu0 0.0
    %1552 = vmatprep.subr.mxu0 0.0
    %1553 = vmatpush1.msra.mxu0 0.0
    %1554 = vmatprep.subr.mxu0 0.0
    %1555 = vmatpush1.msra.mxu0 0.0
    %1556 = vmatprep.subr.mxu0 0.0
    %1557 = vmatpush1.msra.mxu0 0.0
    %1558 = vmatprep.subr.mxu0 0.0
    %1559 = vmatpush1.msra.mxu0 0.0
    %1560 = vmatprep.subr.mxu0 0.0
    %1561 = vmatpush1.msra.mxu0 0.0
    %1562 = vmatprep.subr.mxu0 0.0
    %1563 = vmatpush1.msra.mxu0 0.0
    %1564 = vmatprep.subr.mxu0 0.0
    %1565 = vmatpush1.msra.mxu0 0.0
    %1566 = vmatprep.subr.mxu0 0.0
    %1567 = vmatpush1.msra.mxu0 0.0
    %1568 = vmatprep.subr.mxu0 0.0
    %1569 = vmatpush1.msra.mxu0 0.0
    %1570 = vmatprep.subr.mxu0 0.0
    %1571 = vmatpush1.msra.mxu0 0.0
    %1572 = vmatprep.subr.mxu0 0.0
    %1573 = vmatpush1.msra.mxu0 0.0
    %1574 = vmatprep.subr.mxu0 0.0
    %1575 = vmatpush1.msra.mxu0 0.0
    %1576 = vmatprep.subr.mxu0 0.0
    %1577 = vmatpush1.msra.mxu0 0.0
    %1578 = vmatprep.subr.mxu0 0.0
    %1579 = vmatpush1.msra.mxu0 0.0
    %1580 = vmatprep.subr.mxu0 0.0
    %1581 = vmatpush1.msra.mxu0 0.0
    %1582 = vmatprep.subr.mxu0 0.0
    %1583 = vmatpush1.msra.mxu0 0.0
    %1584 = vmatprep.subr.mxu0 0.0
    %1585 = vmatpush1.msra.mxu0 0.0
    %1586 = vmatprep.subr.mxu0 0.0
    %1587 = vmatpush1.msra.mxu0 0.0
    %1588 = vmatprep.subr.mxu0 0.0
    %1589 = vmatpush1.msra.mxu0 0.0
    %1590 = vmatprep.subr.mxu0 0.0
    %1591 = vmatpush1.msra.mxu0 0.0
    %1592 = vmatprep.mubr.f32.mxu0 0.0
    %1593 = vmatmul.mubr.f32.gmra.mrb[0].mxu0 %v1443
    %v1594 = vpop.f32.mrb[0].mxu0
    %v1595 = vadd.f32 0.0, %v1594
    %v1596 = vpop.f32.mrb[0].mxu0
    %1597 = vdwg.mxu0
    %v1599 = vrot.slane %v1595, 1
    %v1601 = vadd.f32 %v178, %v1599
    %v1602 = vxor.u32 %v1601, 2147483648
    %v1603 = vmul.f32 %v1602, 1.442695
    %v1604 = vpow.pop %v1603
    %v1605 = vadd.f32 %v1604, 1.0
    %v1606 = vrcp.pop %v1605
    %v1607 = vmul.f32 1.0, %v1606
    %v1608 = vtanh.pop %v1601
    %v1610 = vrot.slane %v1432, 7
    %v1612 = vmul.f32 %v1607, %v1610
    %1614 = vrot.lane.b32.xlu0 %v1608, 64
    %v1615 = vpop.permute.xlu0 %1614
    %v1617 = vmul.f32 %v1607, %v1615
    %1619 = vrot.lane.b32.xlu0 %v1617, 32
    %v1620 = vpop.permute.xlu0 %1619
    %v1622 = vadd.f32 %v1612, %v1620
    %v1623 = vtanh.pop %v1622
    %1625 = vrot.lane.b32.xlu0 %v1623, 64
    %v1626 = vpop.permute.xlu0 %1625
    %v1628 = vmul.f32 %v1607, %v1626
    %v1630 = vrot.slane %v1628, 7
    %1631 = vrot.lane.b32.xlu0 %v1630, 32
    %v1632 = vpop.permute.xlu0 %1631
    %v1633 = vsel %vm192, %v1632, 0
    %1635 = vmatprep.subr.mxu0 0.0
    %1636 = vmatpush1.msra.mxu0 %v185
    %1637 = vmatprep.subr.mxu0 0.0
    %1638 = vmatpush1.msra.mxu0 %v186
    %1639 = vmatprep.subr.mxu0 0.0
    %1640 = vmatpush1.msra.mxu0 %v187
    %1641 = vmatprep.subr.mxu0 0.0
    %1642 = vmatpush1.msra.mxu0 %v188
    %1643 = vmatprep.subr.mxu0 0.0
    %1644 = vmatpush1.msra.mxu0 0.0
    %1645 = vmatprep.subr.mxu0 0.0
    %1646 = vmatpush1.msra.mxu0 0.0
    %1647 = vmatprep.subr.mxu0 0.0
    %1648 = vmatpush1.msra.mxu0 0.0
    %1649 = vmatprep.subr.mxu0 0.0
    %1650 = vmatpush1.msra.mxu0 0.0
    %1651 = vmatprep.subr.mxu0 0.0
    %1652 = vmatpush1.msra.mxu0 0.0
    %1653 = vmatprep.subr.mxu0 0.0
    %1654 = vmatpush1.msra.mxu0 0.0
    %1655 = vmatprep.subr.mxu0 0.0
    %1656 = vmatpush1.msra.mxu0 0.0
    %1657 = vmatprep.subr.mxu0 0.0
    %1658 = vmatpush1.msra.mxu0 0.0
    %1659 = vmatprep.subr.mxu0 0.0
    %1660 = vmatpush1.msra.mxu0 0.0
    %1661 = vmatprep.subr.mxu0 0.0
    %1662 = vmatpush1.msra.mxu0 0.0
    %1663 = vmatprep.subr.mxu0 0.0
    %1664 = vmatpush1.msra.mxu0 0.0
    %1665 = vmatprep.subr.mxu0 0.0
    %1666 = vmatpush1.msra.mxu0 0.0
    %1667 = vmatprep.subr.mxu0 0.0
    %1668 = vmatpush1.msra.mxu0 0.0
    %1669 = vmatprep.subr.mxu0 0.0
    %1670 = vmatpush1.msra.mxu0 0.0
    %1671 = vmatprep.subr.mxu0 0.0
    %1672 = vmatpush1.msra.mxu0 0.0
    %1673 = vmatprep.subr.mxu0 0.0
    %1674 = vmatpush1.msra.mxu0 0.0
    %1675 = vmatprep.subr.mxu0 0.0
    %1676 = vmatpush1.msra.mxu0 0.0
    %1677 = vmatprep.subr.mxu0 0.0
    %1678 = vmatpush1.msra.mxu0 0.0
    %1679 = vmatprep.subr.mxu0 0.0
    %1680 = vmatpush1.msra.mxu0 0.0
    %1681 = vmatprep.subr.mxu0 0.0
    %1682 = vmatpush1.msra.mxu0 0.0
    %1683 = vmatprep.subr.mxu0 0.0
    %1684 = vmatpush1.msra.mxu0 0.0
    %1685 = vmatprep.subr.mxu0 0.0
    %1686 = vmatpush1.msra.mxu0 0.0
    %1687 = vmatprep.subr.mxu0 0.0
    %1688 = vmatpush1.msra.mxu0 0.0
    %1689 = vmatprep.subr.mxu0 0.0
    %1690 = vmatpush1.msra.mxu0 0.0
    %1691 = vmatprep.subr.mxu0 0.0
    %1692 = vmatpush1.msra.mxu0 0.0
    %1693 = vmatprep.subr.mxu0 0.0
    %1694 = vmatpush1.msra.mxu0 0.0
    %1695 = vmatprep.subr.mxu0 0.0
    %1696 = vmatpush1.msra.mxu0 0.0
    %1697 = vmatprep.subr.mxu0 0.0
    %1698 = vmatpush1.msra.mxu0 0.0
    %1699 = vmatprep.mubr.f32.mxu0 0.0
    %1700 = vmatmul.mubr.f32.gmra.mrb[0].mxu0 %v1633
    %v1701 = vpop.f32.mrb[0].mxu0
    %v1702 = vadd.f32 %v189, %v1701
    %v1703 = vpop.f32.mrb[0].mxu0
    %1704 = vdwg.mxu0
    %v1705 = vsel %vm374, %v1702, -inf
    %1706 = vmax.xlane.f32.xlu0 %v1705
    %v1707 = vpop.xlane.xlu0 %1706
    %v1708 = vsub.f32 %v1702, %v1707
    %v1709 = vmul.f32 %v1708, 1.442695
    %v1710 = vpow.pop %v1709
    %v1711 = vsel %vm374, %v1710, 0.0
    %1712 = vadd.xlane.f32.xlu0 %v1711
    %v1713 = vpop.xlane.xlu0 %1712
    %v1714 = vlog2.pop %v1713
    %v1715 = vmul.f32 %v1714, 0.6931472
    %v1716 = vsub.f32 %v1708, %v1715
    %1717 = vst [vmem:[#allocation10 + $0x7] sm:$0x1] %v1716
    %1718 = vrot.lane.b32.xlu0 %v1628, 32
    %v1719 = vpop.permute.xlu0 %1718
    %vm1721 = vcmask 261127
    %1722 = vst.msk [vmem:[#allocation11 - $0x7] sm:$0x80] %vm1721, %v1719
    %1724 = vrot.lane.b32.xlu0 %v1622, 96
    %v1725 = vpop.permute.xlu0 %1724
    %1727 = vst.msk [vmem:[#allocation13 - $0x7] sm:$0x80] %vm1721, %v1725
    // Predicated region
    $region50: #{tpu_custom_call.1} parent=1 // pred_check
      _
    $region51: #{tpu_custom_call.1} parent=1 // pred_check_branch
      %1729 = sbr.rel (0) target = $region53
    $region52: #{tpu_custom_call.1} parent=1 // pred_region
      %s1731 = ssub.s32 128, 128
      %1732 = vsyncadd [#allocation4], %s1731
      %s1734 = sshll.u32 [#allocation10], 4
      %s1735 = int_to_ptr.vmem [resolvable:$true] %s1734
      %1737 = dma.vmem_to_hbm [thread:$0]  %s1735, 128, %s8, [#allocation4]
    $region53: #{tpu_custom_call.1} parent=1 // pred_fallthru
      _
    // Predicated region
    $region54: #{tpu_custom_call.1} parent=1 // pred_check
      _
    $region55: #{tpu_custom_call.1} parent=1 // pred_check_branch
      %1739 = sbr.rel (0) target = $region57
    $region56: #{tpu_custom_call.1} parent=1 // pred_region
      %s1741 = ssub.s32 16, 16
      %1742 = vsyncadd [#allocation12], %s1741
      %s1744 = sshll.u32 [#allocation11], 4
      %s1745 = int_to_ptr.vmem [resolvable:$true] %s1744
      %1747 = dma.vmem_to_hbm [thread:$0]  %s1745, 16, %s9, [#allocation12]
    $region57: #{tpu_custom_call.1} parent=1 // pred_fallthru
      _
    // Predicated region
    $region58: #{tpu_custom_call.1} parent=1 // pred_check
      _
    $region59: #{tpu_custom_call.1} parent=1 // pred_check_branch
      %1749 = sbr.rel (0) target = $region61
    $region60: #{tpu_custom_call.1} parent=1 // pred_region
      %s1751 = ssub.s32 16, 16
      %1752 = vsyncadd [#allocation12], %s1751
      %s1754 = sshll.u32 [#allocation13], 4
      %s1755 = int_to_ptr.vmem [resolvable:$true] %s1754
      %1757 = dma.vmem_to_hbm [thread:$0]  %s1755, 16, %s10, [#allocation12]
    $region61: #{tpu_custom_call.1} parent=1 // pred_fallthru
      _
    // Predicated region
    $region62: #{tpu_custom_call.1} parent=1 // pred_check
      _
    $region63: #{tpu_custom_call.1} parent=1 // pred_check_branch
      %1759 = sbr.rel (0) target = $region65
    $region64: #{tpu_custom_call.1} parent=1 // pred_region
      %1760 = dma.done [#allocation4], 128
    $region65: #{tpu_custom_call.1} parent=1 // pred_fallthru
      _
    // Predicated region
    $region66: #{tpu_custom_call.1} parent=1 // pred_check
      _
    $region67: #{tpu_custom_call.1} parent=1 // pred_check_branch
      %1762 = sbr.rel (0) target = $region69
    $region68: #{tpu_custom_call.1} parent=1 // pred_region
      %1763 = dma.done [#allocation12], 16
    $region69: #{tpu_custom_call.1} parent=1 // pred_fallthru
      _
    // Predicated region
    $region70: #{tpu_custom_call.1} parent=1 // pred_check
      _
    $region71: #{tpu_custom_call.1} parent=1 // pred_check_branch
      %1765 = sbr.rel (0) target = $region73
    $region72: #{tpu_custom_call.1} parent=1 // pred_region
      %1766 = dma.done [#allocation12], 16
    $region73: #{tpu_custom_call.1} parent=1 // pred_fallthru
      _
    %1767 = vsyncpa [#allocation3], 1
    %1768 = vsyncpa [#allocation6], 1
    %1769 = vsyncpa [#allocation9], 1
    %1770 = vsyncpa [#allocation4], 1
    %1771 = vsyncpa [#allocation12], 1

</llo_original>
